<compile_context>
chip_gen: v6e
topology: v6e:2x2x1
jax: 0.10.0
libtpu: 0.0.40
codegen_flags: <defaults>
</compile_context>

<pallas_src>
import functools
import math

import jax
import jax.numpy as jnp
from jax import lax
from jax.experimental import pallas as pl
from jax.experimental.pallas import tpu as pltpu

_LN_EPS = 1e-5
_INV_SQRT2 = 1.0 / math.sqrt(2.0)
_F32 = jnp.float32


# --------------------------------- small helpers ---------------------------------
def _round_up(n, m):
    return ((n + m - 1) // m) * m


def _pick_chunk(total, target, quantum):
    """Largest multiple of `quantum` that divides `total` and is <= target (fallback: total)."""
    c = (min(target, total) // quantum) * quantum
    while c >= quantum:
        if total % c == 0:
            return c
        c -= quantum
    return total


def _vmem_cap_bytes():
    try:
        return int(pltpu.get_tpu_info().vmem_capacity_bytes)   # 64 MiB v7x, 128 MiB v5e/v6e
    except Exception:
        return 64 << 20                                        # safe lower bound for all gens


def _vmem_limit_bytes(entries, extra_bytes=0):
    """entries: iterable of (block_shape, itemsize, n_buffers). Chip-aware clamp w/ headroom."""
    want = sum(math.prod(s) * isz * nb for s, isz, nb in entries) + extra_bytes
    cap = _vmem_cap_bytes()
    return int(max(min(want + (4 << 20), cap - (8 << 20)), 16 << 20))


def _layernorm_f32(x, gamma, beta):
    mu = jnp.mean(x, axis=-1, keepdims=True)
    xc = x - mu
    var = jnp.mean(xc * xc, axis=-1, keepdims=True)
    return xc * lax.rsqrt(var + _LN_EPS) * gamma + beta


def _recip(x):
    # EUP approximate reciprocal + one Newton-Raphson step: f32-accurate, no VALU divide.
    r = pl.reciprocal(x, approx=True)
    return r * (2.0 - x * r)


def _const_spec(shape, single_buffer):
    """BlockSpec for a grid-invariant (VMEM-resident) operand."""
    idx = lambda *_: (0,) * len(shape)
    if single_buffer:
        return pl.BlockSpec(shape, idx, pipeline_mode=pl.Buffered(1))
    return pl.BlockSpec(shape, idx)


# ------------------- kernel 1: LayerNorm + Q/K/V projections (token-tiled) -------------------
def _ln_qkv_kernel(x_ref, g_ref, b_ref, wq_ref, wk_ref, wv_ref, q_ref, k_ref, v_ref):
    xn = _layernorm_f32(x_ref[...].astype(_F32), g_ref[...], b_ref[...])
    xn = xn.astype(wq_ref.dtype)            # bf16 MXU path when weights are bf16
    q_ref[...] = jnp.dot(xn, wq_ref[...], preferred_element_type=_F32).astype(q_ref.dtype)
    k_ref[...] = jnp.dot(xn, wk_ref[...], preferred_element_type=_F32).astype(k_ref.dtype)
    v_ref[...] = jnp.dot(xn, wv_ref[...], preferred_element_type=_F32).astype(v_ref.dtype)


# --------- kernel 2: online-softmax attention, one (batch, KV-chunk) per grid step -----------
def _attn_kernel(q_ref, k_ref, v_ref, o_ref, m_scr, l_scr, acc_scr, *, heads, dh, scale):
    kv = pl.program_id(1)

    @pl.when(kv == 0)
    def _init():
        m_scr[...] = jnp.full(m_scr.shape, -jnp.inf, m_scr.dtype)
        l_scr[...] = jnp.zeros(l_scr.shape, l_scr.dtype)
        acc_scr[...] = jnp.zeros(acc_scr.shape, acc_scr.dtype)

    # All heads of this batch per grid step (static unroll amortizes per-step overhead and
    # keeps the MXU fed with consecutive small matmuls).
    for h in range(heads):
        cols = pl.ds(h * dh, dh)
        q = q_ref[:, cols]                                                 # (S,   dh)
        k = k_ref[:, cols]                                                 # (Tkv, dh)
        v = v_ref[:, cols]                                                 # (Tkv, dh)
        s = jnp.dot(q, k.T, preferred_element_type=_F32) * scale           # (S, Tkv) f32
        m_prev = m_scr[h]                                                  # (S, 1)
        m_new = jnp.maximum(m_prev, jnp.max(s, axis=-1, keepdims=True))
        alpha = jnp.exp(m_prev - m_new)
        p = jnp.exp(s - m_new)
        l_scr[h] = alpha * l_scr[h] + jnp.sum(p, axis=-1, keepdims=True)
        acc_scr[h] = alpha * acc_scr[h] + jnp.dot(
            p.astype(v.dtype), v, preferred_element_type=_F32)
        m_scr[h] = m_new

    @pl.when(kv == pl.num_programs(1) - 1)
    def _finalize():
        outs = [acc_scr[h] * _recip(l_scr[h]) for h in range(heads)]       # (S, dh) each
        # single lane-dense (S, heads*dh) store, already in the torch "head-major" feature order
        o_ref[...] = jnp.concatenate(outs, axis=-1).astype(o_ref.dtype)


# ---- kernel 3: attn out-proj + residual + LN2 + GEGLU FFN (hidden-dim chunked) + residual ----
def _proj_ffn_kernel(res_ref, ctx_ref, wo_ref, bo_ref, g2_ref, be2_ref,
                     w1v_ref, b1v_ref, w1g_ref, b1g_ref, w2_ref, b2_ref,
                     o_ref, x_scr, xn_scr, acc_scr, *, approx_gelu):
    j = pl.program_id(1)

    @pl.when(j == 0)
    def _init():
        # attention output projection + first residual, then LN2 (once per token tile)
        x = (res_ref[...].astype(_F32)
             + jnp.dot(ctx_ref[...], wo_ref[...], preferred_element_type=_F32)
             + bo_ref[...])
        x_scr[...] = x
        xn_scr[...] = _layernorm_f32(x, g2_ref[...], be2_ref[...]).astype(xn_scr.dtype)
        acc_scr[...] = jnp.zeros(acc_scr.shape, acc_scr.dtype)

    # GEGLU FFN on one hidden-dim chunk; W1 is pre-split into value/gate halves so the
    # (tm, 2*th) intermediate never exists and the GELU fuses onto the gate matmul result.
    xn = xn_scr[...]
    a = jnp.dot(xn, w1v_ref[...], preferred_element_type=_F32) + b1v_ref[...]
    g = jnp.dot(xn, w1g_ref[...], preferred_element_type=_F32) + b1g_ref[...]
    if approx_gelu:
        gate = jax.nn.gelu(g, approximate=True)              # tanh -> EUP (perf option)
    else:
        gate = 0.5 * g * (1.0 + lax.erf(g * _INV_SQRT2))      # exact erf (torch default)
    hid = (a * gate).astype(w2_ref.dtype)
    acc_scr[...] += jnp.dot(hid, w2_ref[...], preferred_element_type=_F32)

    @pl.when(j == pl.num_programs(1) - 1)
    def _finalize():
        o_ref[...] = (x_scr[...] + acc_scr[...] + b2_ref[...]).astype(o_ref.dtype)


# ------------------------------------- forward impl -------------------------------------
def _forward(x, params, *, block_tokens, block_kv, block_hidden,
             approx_gelu, compute_dtype, single_buffer_weights):
    B, S, dim = x.shape
    heads = int(params["heads"])
    dh = int(params["dim_head"])
    inner = heads * dh
    H = params["w1v"].shape[1]
    N = B * S
    cdt = jnp.dtype(compute_dtype)
    csz = cdt.itemsize
    nbw = 1 if single_buffer_weights else 2     # buffer count for grid-invariant weights

    # ---- tiling ----
    tm = _round_up(min(block_tokens, _round_up(N, 8)), 8)     # token tile (sublane axis)
    n_pad = _round_up(N, tm)
    grid_tokens = n_pad // tm
    tkv = _pick_chunk(S, block_kv, 8)                         # KV chunk (online softmax)
    grid_kv = S // tkv
    th = _pick_chunk(H, block_hidden, 128)                    # FFN hidden chunk
    grid_h = H // th

    # ---- operands: weights cast once to the compute dtype; biases/LN params stay f32 ----
    x2d = x.reshape(N, dim).astype(cdt)
    if n_pad != N:
        x2d = jnp.pad(x2d, ((0, n_pad - N), (0, 0)))
    g1 = params["g1"].reshape(1, dim).astype(_F32)
    be1 = params["b1"].reshape(1, dim).astype(_F32)
    wq = params["wq"].astype(cdt)
    wk = params["wk"].astype(cdt)
    wv = params["wv"].astype(cdt)
    wo = params["wo"].astype(cdt)
    bo = params["bo"].reshape(1, dim).astype(_F32)
    g2 = params["g2"].reshape(1, dim).astype(_F32)
    be2 = params["b2"].reshape(1, dim).astype(_F32)
    w1v = params["w1v"].astype(cdt)
    b1v = params["b1v"].reshape(1, H).astype(_F32)
    w1g = params["w1g"].astype(cdt)
    b1g = params["b1g"].reshape(1, H).astype(_F32)
    w2 = params["w2"].astype(cdt)
    b2f = params["bff2"].reshape(1, dim).astype(_F32)

    # ---- kernel 1: LN1 + QKV projections ----
    vlim1 = _vmem_limit_bytes(
        [((tm, dim), csz, 2), ((1, dim), 4, 2 * nbw)]
        + [((dim, inner), csz, nbw)] * 3 + [((tm, inner), csz, 2)] * 3,
        extra_bytes=2 * tm * dim * 4)
    q2d, k2d, v2d = pl.pallas_call(
        _ln_qkv_kernel,
        out_shape=tuple(jax.ShapeDtypeStruct((n_pad, inner), cdt) for _ in range(3)),
        grid=(grid_tokens,),
        in_specs=[
            pl.BlockSpec((tm, dim), lambda i: (i, 0)),
            _const_spec((1, dim), single_buffer_weights),
            _const_spec((1, dim), single_buffer_weights),
            _const_spec((dim, inner), single_buffer_weights),
            _const_spec((dim, inner), single_buffer_weights),
            _const_spec((dim, inner), single_buffer_weights),
        ],
        out_specs=tuple(pl.BlockSpec((tm, inner), lambda i: (i, 0)) for _ in range(3)),
        compiler_params=pltpu.CompilerParams(
            dimension_semantics=("parallel",), vmem_limit_bytes=vlim1),
    )(x2d, g1, be1, wq, wk, wv)

    # ---- kernel 2: online-softmax attention over KV chunks ----
    # q/k/v stay token-major (n_pad, inner); row blocks select a batch (q) or a KV chunk (k,v).
    scale = float(dh) ** -0.5
    kv_blocks = S // tkv
    vlim2 = _vmem_limit_bytes(
        [((S, inner), csz, 2), ((tkv, inner), csz, 2), ((tkv, inner), csz, 2),
         ((S, inner), csz, 2),
         ((heads, S, 1), 4, 1), ((heads, S, 1), 4, 1), ((heads, S, dh), 4, 1)],
        extra_bytes=3 * S * tkv * 4)                     # live scores/exp temporaries
    ctx2d = pl.pallas_call(
        functools.partial(_attn_kernel, heads=heads, dh=dh, scale=scale),
        out_shape=jax.ShapeDtypeStruct((n_pad, inner), cdt),
        grid=(B, grid_kv),
        in_specs=[
            pl.BlockSpec((S, inner), lambda b, kv: (b, 0)),
            pl.BlockSpec((tkv, inner), lambda b, kv: (b * kv_blocks + kv, 0)),
            pl.BlockSpec((tkv, inner), lambda b, kv: (b * kv_blocks + kv, 0)),
        ],
        out_specs=pl.BlockSpec((S, inner), lambda b, kv: (b, 0)),
        scratch_shapes=[
            pltpu.VMEM((heads, S, 1), jnp.float32),    # running max
            pltpu.VMEM((heads, S, 1), jnp.float32),    # running denominator
            pltpu.VMEM((heads, S, dh), jnp.float32),   # running accumulator
        ],
        compiler_params=pltpu.CompilerParams(
            dimension_semantics=("parallel", "arbitrary"), vmem_limit_bytes=vlim2),
    )(q2d, k2d, v2d)
    # (padded rows >= B*S of ctx2d are never written; they only feed padded output rows,
    #  which are dropped below — all kernel-3 math is row-wise so there is no contamination.)

    # ---- kernel 3: out-proj + residual + LN2 + GEGLU FFN (H-chunked, accumulated) + residual ----
    vlim3 = _vmem_limit_bytes(
        [((tm, dim), csz, 2), ((tm, inner), csz, 2),
         ((inner, dim), csz, nbw), ((1, dim), 4, 4 * nbw),
         ((dim, th), csz, 2), ((1, th), 4, 2), ((dim, th), csz, 2), ((1, th), 4, 2),
         ((th, dim), csz, 2), ((tm, dim), csz, 2),
         ((tm, dim), 4, 1), ((tm, dim), csz, 1), ((tm, dim), 4, 1)],   # scratch
        extra_bytes=4 * tm * th * 4)                     # value/gate/gelu/hid temporaries
    out2d = pl.pallas_call(
        functools.partial(_proj_ffn_kernel, approx_gelu=approx_gelu),
        out_shape=jax.ShapeDtypeStruct((n_pad, dim), cdt),
        grid=(grid_tokens, grid_h),
        in_specs=[
            pl.BlockSpec((tm, dim), lambda i, j: (i, 0)),       # residual (original x)
            pl.BlockSpec((tm, inner), lambda i, j: (i, 0)),     # attention context
            _const_spec((inner, dim), single_buffer_weights),   # Wo
            _const_spec((1, dim), single_buffer_weights),       # bo
            _const_spec((1, dim), single_buffer_weights),       # LN2 gamma
            _const_spec((1, dim), single_buffer_weights),       # LN2 beta
            pl.BlockSpec((dim, th), lambda i, j: (0, j)),       # W1 value-half chunk
            pl.BlockSpec((1, th), lambda i, j: (0, j)),         # b1 value-half chunk
            pl.BlockSpec((dim, th), lambda i, j: (0, j)),       # W1 gate-half chunk
            pl.BlockSpec((1, th), lambda i, j: (0, j)),         # b1 gate-half chunk
            pl.BlockSpec((th, dim), lambda i, j: (j, 0)),       # W2 chunk
            _const_spec((1, dim), single_buffer_weights),       # b2
        ],
        out_specs=pl.BlockSpec((tm, dim), lambda i, j: (i, 0)),
        scratch_shapes=[
            pltpu.VMEM((tm, dim), jnp.float32),    # x after attention residual
            pltpu.VMEM((tm, dim), cdt),            # LN2(x) in matmul dtype
            pltpu.VMEM((tm, dim), jnp.float32),    # FFN accumulator
        ],
        compiler_params=pltpu.CompilerParams(
            dimension_semantics=("parallel", "arbitrary"), vmem_limit_bytes=vlim3),
    )(x2d, ctx2d, wo, bo, g2, be2, w1v, b1v, w1g, b1g, w2, b2f)

    return out2d[:N].reshape(B, S, dim).astype(x.dtype)


def transformer_layer_pallas(x, params, *, block_tokens=512, block_kv=512, block_hidden=1024,
                             approx_gelu=False, compute_dtype=jnp.float32):
    """Eval-mode forward of TransformerLayer. x: (B, S, dim).
    approx_gelu=True and compute_dtype=jnp.bfloat16 are the (non-bit-exact) perf options."""
    kwargs = dict(block_tokens=block_tokens, block_kv=block_kv, block_hidden=block_hidden,
                  approx_gelu=approx_gelu, compute_dtype=compute_dtype)
    try:
        return _forward(x, params, single_buffer_weights=True, **kwargs)
    except Exception:
        # pipeline_mode=pl.Buffered(1) unsupported on this jax build -> default double-buffering
        return _forward(x, params, single_buffer_weights=False, **kwargs)


# ------------------------------- params & pure-JAX reference -------------------------------
def init_params(key, dim, heads, dim_head):
    """Mirrors the torch module's parameters (nn.Linear uniform(-1/sqrt(fan_in), ...) init).
    The fused Linear(dim, 2*dim*mult) of the GEGLU FFN is stored as value/gate halves."""
    inner = heads * dim_head
    H = dim * heads                 # FeedForward(dim, mult=heads) -> hidden = dim * mult
    ks = jax.random.split(key, 15)
    u = jax.random.uniform
    bq = 1.0 / math.sqrt(dim)
    bo = 1.0 / math.sqrt(inner)
    bf1 = 1.0 / math.sqrt(dim)
    bf2 = 1.0 / math.sqrt(H)
    return dict(
        heads=heads, dim_head=dim_head,
        g1=1.0 + 0.1 * jax.random.normal(ks[0], (dim,), jnp.float32),
        b1=0.1 * jax.random.normal(ks[1], (dim,), jnp.float32),
        wq=u(ks[2], (dim, inner), jnp.float32, -bq, bq),
        wk=u(ks[3], (dim, inner), jnp.float32, -bq, bq),
        wv=u(ks[4], (dim, inner), jnp.float32, -bq, bq),
        wo=u(ks[5], (inner, dim), jnp.float32, -bo, bo),
        bo=u(ks[6], (dim,), jnp.float32, -bo, bo),
        g2=1.0 + 0.1 * jax.random.normal(ks[7], (dim,), jnp.float32),
        b2=0.1 * jax.random.normal(ks[8], (dim,), jnp.float32),
        w1v=u(ks[9], (dim, H), jnp.float32, -bf1, bf1),
        b1v=u(ks[10], (H,), jnp.float32, -bf1, bf1),
        w1g=u(ks[11], (dim, H), jnp.float32, -bf1, bf1),
        b1g=u(ks[12], (H,), jnp.float32, -bf1, bf1),
        w2=u(ks[13], (H, dim), jnp.float32, -bf2, bf2),
        bff2=u(ks[14], (dim,), jnp.float32, -bf2, bf2),
    )


def transformer_layer_ref(x, p):
    def ln(t, g, b):
        mu = t.mean(-1, keepdims=True)
        var = ((t - mu) ** 2).mean(-1, keepdims=True)
        return (t - mu) / jnp.sqrt(var + _LN_EPS) * g + b

    with jax.default_matmul_precision("highest"):
        B, S, dim = x.shape
        heads, dh = int(p["heads"]), int(p["dim_head"])
        inner = heads * dh
        h = ln(x, p["g1"], p["b1"])
        q = (h @ p["wq"]).reshape(B, S, heads, dh).transpose(0, 2, 1, 3)
        k = (h @ p["wk"]).reshape(B, S, heads, dh).transpose(0, 2, 1, 3)
        v = (h @ p["wv"]).reshape(B, S, heads, dh).transpose(0, 2, 1, 3)
        s = jnp.einsum("bhqd,bhkd->bhqk", q, k) * (float(dh) ** -0.5)
        a = jax.nn.softmax(s, axis=-1)
        ctx = jnp.einsum("bhqk,bhkd->bhqd", a, v).transpose(0, 2, 1, 3).reshape(B, S, inner)
        x = x + ctx @ p["wo"] + p["bo"]
        h2 = ln(x, p["g2"], p["b2"])
        hid = (h2 @ p["w1v"] + p["b1v"]) * jax.nn.gelu(h2 @ p["w1g"] + p["b1g"],
                                                       approximate=False)
        return x + hid @ p["w2"] + p["bff2"]


if __name__ == "__main__":
    # Small shapes consistent with the module: dim=32, heads=4, dim_head=8 (mult=heads -> H=128).
    B, S, dim, heads, dim_head = 2, 16, 32, 4, 8

    key = jax.random.PRNGKey(0)
    kx, kp = jax.random.split(key)
    x = jax.random.normal(kx, (B, S, dim), jnp.float32)
    params = init_params(kp, dim, heads, dim_head)

    # f32 path with small tiles so the token grid (4 steps) and KV grid (2 chunks) both have
    # multiple steps, exercising the pipelines and the accumulator init/finalize paths.
    out = transformer_layer_pallas(x, params, block_tokens=8, block_kv=8, block_hidden=128)
    out = jax.block_until_ready(out)

    ref = transformer_layer_ref(x, params)
    assert out.shape == (B, S, dim)
    err = float(jnp.max(jnp.abs(out - ref)))
    # Tolerance leaves headroom for the MXU's multi-pass handling of f32 matmuls at DEFAULT
    # precision; genuine indexing/layout bugs would produce O(0.1+) errors.
    assert jnp.allclose(out, ref, atol=1e-2, rtol=1e-2), f"mismatch vs reference, max_err={err}"

    # bf16 fast path (bf16 weights/activations, f32 accumulation + f32 LN/softmax/GELU).
    out_bf16 = transformer_layer_pallas(x, params, block_tokens=16,
                                        compute_dtype=jnp.bfloat16)
    out_bf16 = jax.block_until_ready(out_bf16)
    assert out_bf16.shape == (B, S, dim)
    assert bool(jnp.all(jnp.isfinite(out_bf16)))
    err_bf16 = float(jnp.max(jnp.abs(out_bf16 - ref)))
    assert jnp.allclose(out_bf16, ref, atol=0.25, rtol=0.05), f"bf16 path off, max_err={err_bf16}"

    print("KERNEL_OK")
</pallas_src>

<mosaic_0001>
module attributes {stable_mosaic.version = 11 : i64} {
  func.func @_ln_qkv_kernel(%arg0: i32, %arg1: memref<8x32xf32, #tpu.memory_space<vmem>>, %arg2: memref<1x32xf32, #tpu.memory_space<vmem>>, %arg3: memref<1x32xf32, #tpu.memory_space<vmem>>, %arg4: memref<32x32xf32, #tpu.memory_space<vmem>>, %arg5: memref<32x32xf32, #tpu.memory_space<vmem>>, %arg6: memref<32x32xf32, #tpu.memory_space<vmem>>, %arg7: memref<8x32xf32, #tpu.memory_space<vmem>>, %arg8: memref<8x32xf32, #tpu.memory_space<vmem>>, %arg9: memref<8x32xf32, #tpu.memory_space<vmem>>) attributes {dimension_semantics = [#tpu.dimension_semantics<parallel>], iteration_bounds = array<i64: 4>, scalar_prefetch = 0 : i64, scratch_operands = 0 : i64, tpu.core_type = #tpu.core_type<tc>, window_params = [{transform_indices = @transform_0, window_bounds = array<i64: 8, 32>}, {pipeline_mode = #tpu.pipeline_mode<synchronous>, transform_indices = @transform_1, window_bounds = array<i64: 1, 32>}, {pipeline_mode = #tpu.pipeline_mode<synchronous>, transform_indices = @transform_2, window_bounds = array<i64: 1, 32>}, {pipeline_mode = #tpu.pipeline_mode<synchronous>, transform_indices = @transform_3, window_bounds = array<i64: 32, 32>}, {pipeline_mode = #tpu.pipeline_mode<synchronous>, transform_indices = @transform_4, window_bounds = array<i64: 32, 32>}, {pipeline_mode = #tpu.pipeline_mode<synchronous>, transform_indices = @transform_5, window_bounds = array<i64: 32, 32>}, {transform_indices = @transform_6, window_bounds = array<i64: 8, 32>}, {transform_indices = @transform_7, window_bounds = array<i64: 8, 32>}, {transform_indices = @transform_8, window_bounds = array<i64: 8, 32>}]} {
    %c0 = arith.constant 0 : index
    %c0_0 = arith.constant 0 : index
    %0 = vector.load %arg1[%c0, %c0_0] : memref<8x32xf32, #tpu.memory_space<vmem>>, vector<8x32xf32>
    %c0_1 = arith.constant 0 : index
    %c0_2 = arith.constant 0 : index
    %1 = vector.load %arg2[%c0_1, %c0_2] : memref<1x32xf32, #tpu.memory_space<vmem>>, vector<1x32xf32>
    %c0_3 = arith.constant 0 : index
    %c0_4 = arith.constant 0 : index
    %2 = vector.load %arg3[%c0_3, %c0_4] : memref<1x32xf32, #tpu.memory_space<vmem>>, vector<1x32xf32>
    %cst = arith.constant dense<0.000000e+00> : vector<8xf32>
    %3 = vector.multi_reduction <add>, %0, %cst [1] : vector<8x32xf32> to vector<8xf32>
    %4 = vector.shape_cast %3 : vector<8xf32> to vector<8x1xf32>
    %cst_5 = arith.constant 3.200000e+01 : f32
    %5 = vector.broadcast %cst_5 : f32 to vector<8x1xf32>
    %6 = arith.divf %4, %5 : vector<8x1xf32>
    %7 = vector.broadcast %6 : vector<8x1xf32> to vector<8x32xf32>
    %8 = arith.subf %0, %7 : vector<8x32xf32>
    %9 = arith.mulf %8, %8 : vector<8x32xf32>
    %cst_6 = arith.constant dense<0.000000e+00> : vector<8xf32>
    %10 = vector.multi_reduction <add>, %9, %cst_6 [1] : vector<8x32xf32> to vector<8xf32>
    %11 = vector.shape_cast %10 : vector<8xf32> to vector<8x1xf32>
    %cst_7 = arith.constant 3.200000e+01 : f32
    %12 = vector.broadcast %cst_7 : f32 to vector<8x1xf32>
    %13 = arith.divf %11, %12 : vector<8x1xf32>
    %cst_8 = arith.constant 9.99999974E-6 : f32
    %14 = vector.broadcast %cst_8 : f32 to vector<8x1xf32>
    %15 = arith.addf %13, %14 : vector<8x1xf32>
    %16 = math.rsqrt %15 : vector<8x1xf32>
    %17 = vector.broadcast %16 : vector<8x1xf32> to vector<8x32xf32>
    %18 = arith.mulf %8, %17 : vector<8x32xf32>
    %19 = vector.broadcast %1 : vector<1x32xf32> to vector<8x32xf32>
    %20 = arith.mulf %18, %19 : vector<8x32xf32>
    %21 = vector.broadcast %2 : vector<1x32xf32> to vector<8x32xf32>
    %22 = arith.addf %20, %21 : vector<8x32xf32>
    %c0_9 = arith.constant 0 : index
    %c0_10 = arith.constant 0 : index
    %23 = vector.load %arg4[%c0_9, %c0_10] : memref<32x32xf32, #tpu.memory_space<vmem>>, vector<32x32xf32>
    %cst_11 = arith.constant dense<0.000000e+00> : vector<8x32xf32>
    %24 = tpu.matmul %22, %23, %cst_11 {dimension_numbers = #tpu.dot_dimension_numbers<[1], [0], [0], [1], [0, 0, 1, 1], [], []>} : vector<8x32xf32>, vector<32x32xf32>, vector<8x32xf32> -> vector<8x32xf32>
    %c0_12 = arith.constant 0 : index
    %c0_13 = arith.constant 0 : index
    %25 = vector.load %arg7[%c0_12, %c0_13] : memref<8x32xf32, #tpu.memory_space<vmem>>, vector<8x32xf32>
    tpu.vector_store %arg7[%c0_12, %c0_13], %24 {strides = array<i32>} : memref<8x32xf32, #tpu.memory_space<vmem>>, vector<8x32xf32>,
    %c0_14 = arith.constant 0 : index
    %c0_15 = arith.constant 0 : index
    %26 = vector.load %arg5[%c0_14, %c0_15] : memref<32x32xf32, #tpu.memory_space<vmem>>, vector<32x32xf32>
    %cst_16 = arith.constant dense<0.000000e+00> : vector<8x32xf32>
    %27 = tpu.matmul %22, %26, %cst_16 {dimension_numbers = #tpu.dot_dimension_numbers<[1], [0], [0], [1], [0, 0, 1, 1], [], []>} : vector<8x32xf32>, vector<32x32xf32>, vector<8x32xf32> -> vector<8x32xf32>
    %c0_17 = arith.constant 0 : index
    %c0_18 = arith.constant 0 : index
    %28 = vector.load %arg8[%c0_17, %c0_18] : memref<8x32xf32, #tpu.memory_space<vmem>>, vector<8x32xf32>
    tpu.vector_store %arg8[%c0_17, %c0_18], %27 {strides = array<i32>} : memref<8x32xf32, #tpu.memory_space<vmem>>, vector<8x32xf32>,
    %c0_19 = arith.constant 0 : index
    %c0_20 = arith.constant 0 : index
    %29 = vector.load %arg6[%c0_19, %c0_20] : memref<32x32xf32, #tpu.memory_space<vmem>>, vector<32x32xf32>
    %cst_21 = arith.constant dense<0.000000e+00> : vector<8x32xf32>
    %30 = tpu.matmul %22, %29, %cst_21 {dimension_numbers = #tpu.dot_dimension_numbers<[1], [0], [0], [1], [0, 0, 1, 1], [], []>} : vector<8x32xf32>, vector<32x32xf32>, vector<8x32xf32> -> vector<8x32xf32>
    %c0_22 = arith.constant 0 : index
    %c0_23 = arith.constant 0 : index
    %31 = vector.load %arg9[%c0_22, %c0_23] : memref<8x32xf32, #tpu.memory_space<vmem>>, vector<8x32xf32>
    tpu.vector_store %arg9[%c0_22, %c0_23], %30 {strides = array<i32>} : memref<8x32xf32, #tpu.memory_space<vmem>>, vector<8x32xf32>,
    return
  }
  func.func @transform_0(%arg0: i32) -> (i32, i32) {
    %c0_i32 = arith.constant 0 : i32
    %c0_i32_0 = arith.constant 0 : i32
    return %arg0, %c0_i32 : i32, i32
  }
  func.func @transform_1(%arg0: i32) -> (i32, i32) {
    %c0_i32 = arith.constant 0 : i32
    %c0_i32_0 = arith.constant 0 : i32
    %c0_i32_1 = arith.constant 0 : i32
    return %c0_i32, %c0_i32_0 : i32, i32
  }
  func.func @transform_2(%arg0: i32) -> (i32, i32) {
    %c0_i32 = arith.constant 0 : i32
    %c0_i32_0 = arith.constant 0 : i32
    %c0_i32_1 = arith.constant 0 : i32
    return %c0_i32, %c0_i32_0 : i32, i32
  }
  func.func @transform_3(%arg0: i32) -> (i32, i32) {
    %c0_i32 = arith.constant 0 : i32
    %c0_i32_0 = arith.constant 0 : i32
    %c0_i32_1 = arith.constant 0 : i32
    return %c0_i32, %c0_i32_0 : i32, i32
  }
  func.func @transform_4(%arg0: i32) -> (i32, i32) {
    %c0_i32 = arith.constant 0 : i32
    %c0_i32_0 = arith.constant 0 : i32
    %c0_i32_1 = arith.constant 0 : i32
    return %c0_i32, %c0_i32_0 : i32, i32
  }
  func.func @transform_5(%arg0: i32) -> (i32, i32) {
    %c0_i32 = arith.constant 0 : i32
    %c0_i32_0 = arith.constant 0 : i32
    %c0_i32_1 = arith.constant 0 : i32
    return %c0_i32, %c0_i32_0 : i32, i32
  }
  func.func @transform_6(%arg0: i32) -> (i32, i32) {
    %c0_i32 = arith.constant 0 : i32
    %c0_i32_0 = arith.constant 0 : i32
    return %arg0, %c0_i32 : i32, i32
  }
  func.func @transform_7(%arg0: i32) -> (i32, i32) {
    %c0_i32 = arith.constant 0 : i32
    %c0_i32_0 = arith.constant 0 : i32
    return %arg0, %c0_i32 : i32, i32
  }
  func.func @transform_8(%arg0: i32) -> (i32, i32) {
    %c0_i32 = arith.constant 0 : i32
    %c0_i32_0 = arith.constant 0 : i32
    return %arg0, %c0_i32 : i32, i32
  }
}

module attributes {stable_mosaic.version = 11 : i64} {
  func.func @_ln_qkv_kernel(%arg0: i32, %arg1: memref<8x32xf32, #tpu.memory_space<vmem>>, %arg2: memref<1x32xf32, #tpu.memory_space<vmem>>, %arg3: memref<1x32xf32, #tpu.memory_space<vmem>>, %arg4: memref<32x32xf32, #tpu.memory_space<vmem>>, %arg5: memref<32x32xf32, #tpu.memory_space<vmem>>, %arg6: memref<32x32xf32, #tpu.memory_space<vmem>>, %arg7: memref<8x32xf32, #tpu.memory_space<vmem>>, %arg8: memref<8x32xf32, #tpu.memory_space<vmem>>, %arg9: memref<8x32xf32, #tpu.memory_space<vmem>>) attributes {dimension_semantics = [#tpu.dimension_semantics<parallel>], iteration_bounds = array<i64: 4>, scalar_prefetch = 0 : i64, scratch_operands = 0 : i64, tpu.core_type = #tpu.core_type<tc>, window_params = [{transform_indices = @transform_0, window_bounds = array<i64: 8, 32>}, {pipeline_mode = #tpu.pipeline_mode<synchronous>, transform_indices = @transform_1, window_bounds = array<i64: 1, 32>}, {pipeline_mode = #tpu.pipeline_mode<synchronous>, transform_indices = @transform_2, window_bounds = array<i64: 1, 32>}, {pipeline_mode = #tpu.pipeline_mode<synchronous>, transform_indices = @transform_3, window_bounds = array<i64: 32, 32>}, {pipeline_mode = #tpu.pipeline_mode<synchronous>, transform_indices = @transform_4, window_bounds = array<i64: 32, 32>}, {pipeline_mode = #tpu.pipeline_mode<synchronous>, transform_indices = @transform_5, window_bounds = array<i64: 32, 32>}, {transform_indices = @transform_6, window_bounds = array<i64: 8, 32>}, {transform_indices = @transform_7, window_bounds = array<i64: 8, 32>}, {transform_indices = @transform_8, window_bounds = array<i64: 8, 32>}]} {
    %c0 = arith.constant 0 : index
    %c0_0 = arith.constant 0 : index
    %0 = vector.load %arg1[%c0, %c0_0] : memref<8x32xf32, #tpu.memory_space<vmem>>, vector<8x32xf32>
    %c0_1 = arith.constant 0 : index
    %c0_2 = arith.constant 0 : index
    %1 = vector.load %arg2[%c0_1, %c0_2] : memref<1x32xf32, #tpu.memory_space<vmem>>, vector<1x32xf32>
    %c0_3 = arith.constant 0 : index
    %c0_4 = arith.constant 0 : index
    %2 = vector.load %arg3[%c0_3, %c0_4] : memref<1x32xf32, #tpu.memory_space<vmem>>, vector<1x32xf32>
    %cst = arith.constant dense<0.000000e+00> : vector<8xf32>
    %3 = vector.multi_reduction <add>, %0, %cst [1] : vector<8x32xf32> to vector<8xf32>
    %4 = vector.shape_cast %3 : vector<8xf32> to vector<8x1xf32>
    %cst_5 = arith.constant 3.200000e+01 : f32
    %5 = vector.broadcast %cst_5 : f32 to vector<8x1xf32>
    %6 = arith.divf %4, %5 : vector<8x1xf32>
    %7 = vector.broadcast %6 : vector<8x1xf32> to vector<8x32xf32>
    %8 = arith.subf %0, %7 : vector<8x32xf32>
    %9 = arith.mulf %8, %8 : vector<8x32xf32>
    %cst_6 = arith.constant dense<0.000000e+00> : vector<8xf32>
    %10 = vector.multi_reduction <add>, %9, %cst_6 [1] : vector<8x32xf32> to vector<8xf32>
    %11 = vector.shape_cast %10 : vector<8xf32> to vector<8x1xf32>
    %cst_7 = arith.constant 3.200000e+01 : f32
    %12 = vector.broadcast %cst_7 : f32 to vector<8x1xf32>
    %13 = arith.divf %11, %12 : vector<8x1xf32>
    %cst_8 = arith.constant 9.99999974E-6 : f32
    %14 = vector.broadcast %cst_8 : f32 to vector<8x1xf32>
    %15 = arith.addf %13, %14 : vector<8x1xf32>
    %16 = math.rsqrt %15 : vector<8x1xf32>
    %17 = vector.broadcast %16 : vector<8x1xf32> to vector<8x32xf32>
    %18 = arith.mulf %8, %17 : vector<8x32xf32>
    %19 = vector.broadcast %1 : vector<1x32xf32> to vector<8x32xf32>
    %20 = arith.mulf %18, %19 : vector<8x32xf32>
    %21 = vector.broadcast %2 : vector<1x32xf32> to vector<8x32xf32>
    %22 = arith.addf %20, %21 : vector<8x32xf32>
    %c0_9 = arith.constant 0 : index
    %c0_10 = arith.constant 0 : index
    %23 = vector.load %arg4[%c0_9, %c0_10] : memref<32x32xf32, #tpu.memory_space<vmem>>, vector<32x32xf32>
    %cst_11 = arith.constant dense<0.000000e+00> : vector<8x32xf32>
    %24 = tpu.matmul %22, %23, %cst_11 {dimension_numbers = #tpu.dot_dimension_numbers<[1], [0], [0], [1], [0, 0, 1, 1], [], []>} : vector<8x32xf32>, vector<32x32xf32>, vector<8x32xf32> -> vector<8x32xf32>
    %c0_12 = arith.constant 0 : index
    %c0_13 = arith.constant 0 : index
    %25 = vector.load %arg7[%c0_12, %c0_13] : memref<8x32xf32, #tpu.memory_space<vmem>>, vector<8x32xf32>
    tpu.vector_store %arg7[%c0_12, %c0_13], %24 {strides = array<i32>} : memref<8x32xf32, #tpu.memory_space<vmem>>, vector<8x32xf32>,
    %c0_14 = arith.constant 0 : index
    %c0_15 = arith.constant 0 : index
    %26 = vector.load %arg5[%c0_14, %c0_15] : memref<32x32xf32, #tpu.memory_space<vmem>>, vector<32x32xf32>
    %cst_16 = arith.constant dense<0.000000e+00> : vector<8x32xf32>
    %27 = tpu.matmul %22, %26, %cst_16 {dimension_numbers = #tpu.dot_dimension_numbers<[1], [0], [0], [1], [0, 0, 1, 1], [], []>} : vector<8x32xf32>, vector<32x32xf32>, vector<8x32xf32> -> vector<8x32xf32>
    %c0_17 = arith.constant 0 : index
    %c0_18 = arith.constant 0 : index
    %28 = vector.load %arg8[%c0_17, %c0_18] : memref<8x32xf32, #tpu.memory_space<vmem>>, vector<8x32xf32>
    tpu.vector_store %arg8[%c0_17, %c0_18], %27 {strides = array<i32>} : memref<8x32xf32, #tpu.memory_space<vmem>>, vector<8x32xf32>,
    %c0_19 = arith.constant 0 : index
    %c0_20 = arith.constant 0 : index
    %29 = vector.load %arg6[%c0_19, %c0_20] : memref<32x32xf32, #tpu.memory_space<vmem>>, vector<32x32xf32>
    %cst_21 = arith.constant dense<0.000000e+00> : vector<8x32xf32>
    %30 = tpu.matmul %22, %29, %cst_21 {dimension_numbers = #tpu.dot_dimension_numbers<[1], [0], [0], [1], [0, 0, 1, 1], [], []>} : vector<8x32xf32>, vector<32x32xf32>, vector<8x32xf32> -> vector<8x32xf32>
    %c0_22 = arith.constant 0 : index
    %c0_23 = arith.constant 0 : index
    %31 = vector.load %arg9[%c0_22, %c0_23] : memref<8x32xf32, #tpu.memory_space<vmem>>, vector<8x32xf32>
    tpu.vector_store %arg9[%c0_22, %c0_23], %30 {strides = array<i32>} : memref<8x32xf32, #tpu.memory_space<vmem>>, vector<8x32xf32>,
    return
  }
  func.func @transform_0(%arg0: i32) -> (i32, i32) {
    %c0_i32 = arith.constant 0 : i32
    %c0_i32_0 = arith.constant 0 : i32
    return %arg0, %c0_i32 : i32, i32
  }
  func.func @transform_1(%arg0: i32) -> (i32, i32) {
    %c0_i32 = arith.constant 0 : i32
    %c0_i32_0 = arith.constant 0 : i32
    %c0_i32_1 = arith.constant 0 : i32
    return %c0_i32, %c0_i32_0 : i32, i32
  }
  func.func @transform_2(%arg0: i32) -> (i32, i32) {
    %c0_i32 = arith.constant 0 : i32
    %c0_i32_0 = arith.constant 0 : i32
    %c0_i32_1 = arith.constant 0 : i32
    return %c0_i32, %c0_i32_0 : i32, i32
  }
  func.func @transform_3(%arg0: i32) -> (i32, i32) {
    %c0_i32 = arith.constant 0 : i32
    %c0_i32_0 = arith.constant 0 : i32
    %c0_i32_1 = arith.constant 0 : i32
    return %c0_i32, %c0_i32_0 : i32, i32
  }
  func.func @transform_4(%arg0: i32) -> (i32, i32) {
    %c0_i32 = arith.constant 0 : i32
    %c0_i32_0 = arith.constant 0 : i32
    %c0_i32_1 = arith.constant 0 : i32
    return %c0_i32, %c0_i32_0 : i32, i32
  }
  func.func @transform_5(%arg0: i32) -> (i32, i32) {
    %c0_i32 = arith.constant 0 : i32
    %c0_i32_0 = arith.constant 0 : i32
    %c0_i32_1 = arith.constant 0 : i32
    return %c0_i32, %c0_i32_0 : i32, i32
  }
  func.func @transform_6(%arg0: i32) -> (i32, i32) {
    %c0_i32 = arith.constant 0 : i32
    %c0_i32_0 = arith.constant 0 : i32
    return %arg0, %c0_i32 : i32, i32
  }
  func.func @transform_7(%arg0: i32) -> (i32, i32) {
    %c0_i32 = arith.constant 0 : i32
    %c0_i32_0 = arith.constant 0 : i32
    return %arg0, %c0_i32 : i32, i32
  }
  func.func @transform_8(%arg0: i32) -> (i32, i32) {
    %c0_i32 = arith.constant 0 : i32
    %c0_i32_0 = arith.constant 0 : i32
    return %arg0, %c0_i32 : i32, i32
  }
}

</mosaic_0001>

<llo_original>
// kernel: tpu_custom_call.1
$region0: #{tpu_custom_call.1}
  #allocation0 [shape = 'u32[]', space=smem, size = 0x4, offset = 0x4, fixed_abs, tag = 'smem constant byte address 0x4 - core index']
  #allocation1 [shape = 'u32[144,128]{1,0:T(1,128)}', space=vmem, size = 0x12000, scoped, tag = 'internal scratch']
  %s0 = inlined_call_operand.hbm [shape: f32[32,32], index: 0, kind: input, shape index: {}]
  %s1 = inlined_call_operand.vmem [shape: f32[1,32], index: 1, kind: input, shape index: {}]
  %s2 = inlined_call_operand.vmem [shape: f32[1,32], index: 2, kind: input, shape index: {}]
  %s3 = inlined_call_operand.hbm [shape: f32[32,32], index: 3, kind: input, shape index: {}]
  %s4 = inlined_call_operand.hbm [shape: f32[32,32], index: 4, kind: input, shape index: {}]
  %s5 = inlined_call_operand.hbm [shape: f32[32,32], index: 5, kind: input, shape index: {}]
  %s6 = inlined_call_operand.hbm [shape: f32[32,32], index: 6, kind: output, shape index: {0}]
  %s7 = inlined_call_operand.hbm [shape: f32[32,32], index: 7, kind: output, shape index: {1}]
  %s8 = inlined_call_operand.hbm [shape: f32[32,32], index: 8, kind: output, shape index: {2}]
  %9 = xla_tuple %s6, %s7, %s8
  %s10 = sld [smem:[#allocation0]]
  $region89: #{tpu_custom_call.1} parent=0
    _
  %s12 = ssub.s32 1, %s10
  %s13 = scalar_select 0, %s12, %s10
  $region1: #{tpu_custom_call.1} parent=0
    #allocation2 [shape = 'u8[8192]{0}', space=vmem, size = 0x2000, scoped, tag = 'input window, operand 0']
    #allocation3 [shape = 's32[2]{0}', space=sflag, size = 0x8, scoped, tag = 'scoped memory for tpu_custom_call.1']
    #allocation4 [shape = 's32[2]{0}', space=sflag, size = 0x8, scoped, tag = 'scoped memory for tpu_custom_call.1']
    #allocation5 [shape = 'u8[16384]{0}', space=vmem, size = 0x4000, scoped, tag = 'input window, operand 3, single buffered']
    #allocation6 [shape = 's32[1]{0}', space=sflag, size = 0x4, scoped, tag = 'scoped memory for tpu_custom_call.1']
    #allocation7 [shape = 'u8[16384]{0}', space=vmem, size = 0x4000, scoped, tag = 'input window, operand 4, single buffered']
    #allocation8 [shape = 'u8[16384]{0}', space=vmem, size = 0x4000, scoped, tag = 'input window, operand 5, single buffered']
    #allocation9 [shape = 's32[1]{0}', space=sflag, size = 0x4, scoped, tag = 'scoped memory for tpu_custom_call.1']
    #allocation10 [shape = 'u8[8192]{0}', space=vmem, size = 0x2000, scoped, tag = 'output window, operand 0']
    #allocation11 [shape = 'u8[8192]{0}', space=vmem, size = 0x2000, scoped, tag = 'output window, operand 1']
    #allocation12 [shape = 's32[2]{0}', space=sflag, size = 0x8, scoped, tag = 'scoped memory for tpu_custom_call.1']
    #allocation13 [shape = 'u8[8192]{0}', space=vmem, size = 0x2000, scoped, tag = 'output window, operand 2']
    %14 = vsyncpa [#allocation3], 0
    %s15 = scalar_lea.sflag [#allocation3], 1
    %16 = vsyncpa %s15, 0
    %17 = vsyncpa [#allocation6], 0
    %18 = vsyncpa [#allocation9], 0
    %19 = vsyncpa [#allocation4], 0
    %s20 = scalar_lea.sflag [#allocation4], 1
    %21 = vsyncpa %s20, 0
    %22 = vsyncpa [#allocation12], 0
    %s23 = scalar_lea.sflag [#allocation12], 1
    %24 = vsyncpa %s23, 0
    loop: start=0, step=1, limit=6
    $region2: #{tpu_custom_call.1} parent=1 // loop_pre_header
      _
    $region3: #{tpu_custom_call.1} parent=1 // loop_header
      %s26 = sphi 0, %s30
      %p27 = scmp.ge.s32.totalorder %s26, 6
      %s36 = sphi 0, %s38
      %s39 = sphi 0, %s36
      %s40 = sphi 0, %s39
      %s56 = sphi 0, %s40
      %s60 = sphi 0, %s60
      %s62 = sphi 0, %s60
      %s63 = sphi 0, %s62
      %s77 = sphi 0, %s63
      %s81 = sphi 0, %s81
      %s83 = sphi 0, %s81
      %s84 = sphi 0, %s83
      %s98 = sphi 0, %s84
      %s102 = sphi 0, %s102
      %s104 = sphi 0, %s102
      %s105 = sphi 0, %s104
      %s119 = sphi 0, %s105
      %s123 = sphi 0, %s123
      %s125 = sphi 0, %s123
      %s126 = sphi 0, %s125
      %s140 = sphi 0, %s126
      %s144 = sphi 0, %s144
      %s146 = sphi 0, %s144
      %s147 = sphi 0, %s146
      %s161 = sphi 0, %s147
      %s167 = sphi 0, %s169
      %s170 = sphi 0, %s167
      %s171 = sphi 0, %s170
      %s187 = sphi 0, %s171
      %s193 = sphi 0, %s195
      %s196 = sphi 0, %s193
      %s197 = sphi 0, %s196
      %s213 = sphi 0, %s197
      %s219 = sphi 0, %s221
      %s222 = sphi 0, %s219
      %s223 = sphi 0, %s222
      %s239 = sphi 0, %s223
    $region4: #{tpu_custom_call.1} parent=1 // loop_header_branch
      %29 = sbr.rel (%p27) target = $region8
    $region5: #{tpu_custom_call.1} parent=1 // loop_body
      %s31 = ssub.s32 %s26, 1
      %s32 = ssub.s32 %s26, 2
      %s33 = sadd.s32 %s26, 1
      %s34 = ssub.s32 %s26, %s33
      %p35 = scmp.eq.s32.totalorder %s34, 0
      %s37 = sadd.s32 %s36, 1
      %s38 = scalar_select %p35, %s36, %s37
      %p41 = pneg %p35
      %p42 = scmp.eq.s32.totalorder %s26, 3
      %p43 = por %p41, %p42
      %p44 = scmp.ne.s32.totalorder %s36, %s39
      %p45 = scmp.eq.s32.totalorder %s26, 0
      %p46 = por %p44, %p45
      %p47 = scmp.ne.s32.totalorder %s36, %s39
      %p48 = scmp.eq.s32.totalorder %s31, 3
      %p49 = por %p47, %p48
      %p50 = scmp.ne.s32.totalorder %s39, %s40
      %p51 = scmp.eq.s32.totalorder %s31, 0
      %p52 = por %p50, %p51
      %p53 = scmp.ne.s32.totalorder %s39, %s40
      %p54 = scmp.eq.s32.totalorder %s32, 3
      %p55 = por %p53, %p54
      %p57 = scmp.ne.s32.totalorder %s40, %s56
      %p58 = scmp.eq.s32.totalorder %s32, 0
      %p59 = por %p57, %p58
      %s61 = sadd.s32 %s60, 1
      %p64 = scmp.eq.s32.totalorder %s26, 3
      %p65 = scmp.ne.s32.totalorder %s60, %s62
      %p66 = scmp.eq.s32.totalorder %s26, 0
      %p67 = por %p65, %p66
      %p68 = scmp.ne.s32.totalorder %s60, %s62
      %p69 = scmp.eq.s32.totalorder %s31, 3
      %p70 = por %p68, %p69
      %p71 = scmp.ne.s32.totalorder %s62, %s63
      %p72 = scmp.eq.s32.totalorder %s31, 0
      %p73 = por %p71, %p72
      %p74 = scmp.ne.s32.totalorder %s62, %s63
      %p75 = scmp.eq.s32.totalorder %s32, 3
      %p76 = por %p74, %p75
      %p78 = scmp.ne.s32.totalorder %s63, %s77
      %p79 = scmp.eq.s32.totalorder %s32, 0
      %p80 = por %p78, %p79
      %s82 = sadd.s32 %s81, 1
      %p85 = scmp.eq.s32.totalorder %s26, 3
      %p86 = scmp.ne.s32.totalorder %s81, %s83
      %p87 = scmp.eq.s32.totalorder %s26, 0
      %p88 = por %p86, %p87
      %p89 = scmp.ne.s32.totalorder %s81, %s83
      %p90 = scmp.eq.s32.totalorder %s31, 3
      %p91 = por %p89, %p90
      %p92 = scmp.ne.s32.totalorder %s83, %s84
      %p93 = scmp.eq.s32.totalorder %s31, 0
      %p94 = por %p92, %p93
      %p95 = scmp.ne.s32.totalorder %s83, %s84
      %p96 = scmp.eq.s32.totalorder %s32, 3
      %p97 = por %p95, %p96
      %p99 = scmp.ne.s32.totalorder %s84, %s98
      %p100 = scmp.eq.s32.totalorder %s32, 0
      %p101 = por %p99, %p100
      %s103 = sadd.s32 %s102, 1
      %p106 = scmp.eq.s32.totalorder %s26, 3
      %p107 = scmp.ne.s32.totalorder %s102, %s104
      %p108 = scmp.eq.s32.totalorder %s26, 0
      %p109 = por %p107, %p108
      %p110 = scmp.ne.s32.totalorder %s102, %s104
      %p111 = scmp.eq.s32.totalorder %s31, 3
      %p112 = por %p110, %p111
      %p113 = scmp.ne.s32.totalorder %s104, %s105
      %p114 = scmp.eq.s32.totalorder %s31, 0
      %p115 = por %p113, %p114
      %p116 = scmp.ne.s32.totalorder %s104, %s105
      %p117 = scmp.eq.s32.totalorder %s32, 3
      %p118 = por %p116, %p117
      %p120 = scmp.ne.s32.totalorder %s105, %s119
      %p121 = scmp.eq.s32.totalorder %s32, 0
      %p122 = por %p120, %p121
      %s124 = sadd.s32 %s123, 1
      %p127 = scmp.eq.s32.totalorder %s26, 3
      %p128 = scmp.ne.s32.totalorder %s123, %s125
      %p129 = scmp.eq.s32.totalorder %s26, 0
      %p130 = por %p128, %p129
      %p131 = scmp.ne.s32.totalorder %s123, %s125
      %p132 = scmp.eq.s32.totalorder %s31, 3
      %p133 = por %p131, %p132
      %p134 = scmp.ne.s32.totalorder %s125, %s126
      %p135 = scmp.eq.s32.totalorder %s31, 0
      %p136 = por %p134, %p135
      %p137 = scmp.ne.s32.totalorder %s125, %s126
      %p138 = scmp.eq.s32.totalorder %s32, 3
      %p139 = por %p137, %p138
      %p141 = scmp.ne.s32.totalorder %s126, %s140
      %p142 = scmp.eq.s32.totalorder %s32, 0
      %p143 = por %p141, %p142
      %s145 = sadd.s32 %s144, 1
      %p148 = scmp.eq.s32.totalorder %s26, 3
      %p149 = scmp.ne.s32.totalorder %s144, %s146
      %p150 = scmp.eq.s32.totalorder %s26, 0
      %p151 = por %p149, %p150
      %p152 = scmp.ne.s32.totalorder %s144, %s146
      %p153 = scmp.eq.s32.totalorder %s31, 3
      %p154 = por %p152, %p153
      %p155 = scmp.ne.s32.totalorder %s146, %s147
      %p156 = scmp.eq.s32.totalorder %s31, 0
      %p157 = por %p155, %p156
      %p158 = scmp.ne.s32.totalorder %s146, %s147
      %p159 = scmp.eq.s32.totalorder %s32, 3
      %p160 = por %p158, %p159
      %p162 = scmp.ne.s32.totalorder %s147, %s161
      %p163 = scmp.eq.s32.totalorder %s32, 0
      %p164 = por %p162, %p163
      %s165 = ssub.s32 %s26, %s33
      %p166 = scmp.eq.s32.totalorder %s165, 0
      %s168 = sadd.s32 %s167, 1
      %s169 = scalar_select %p166, %s167, %s168
      %p172 = pneg %p166
      %p173 = scmp.eq.s32.totalorder %s26, 3
      %p174 = por %p172, %p173
      %p175 = scmp.ne.s32.totalorder %s167, %s170
      %p176 = scmp.eq.s32.totalorder %s26, 0
      %p177 = por %p175, %p176
      %p178 = scmp.ne.s32.totalorder %s167, %s170
      %p179 = scmp.eq.s32.totalorder %s31, 3
      %p180 = por %p178, %p179
      %p181 = scmp.ne.s32.totalorder %s170, %s171
      %p182 = scmp.eq.s32.totalorder %s31, 0
      %p183 = por %p181, %p182
      %p184 = scmp.ne.s32.totalorder %s170, %s171
      %p185 = scmp.eq.s32.totalorder %s32, 3
      %p186 = por %p184, %p185
      %p188 = scmp.ne.s32.totalorder %s171, %s187
      %p189 = scmp.eq.s32.totalorder %s32, 0
      %p190 = por %p188, %p189
      %s191 = ssub.s32 %s26, %s33
      %p192 = scmp.eq.s32.totalorder %s191, 0
      %s194 = sadd.s32 %s193, 1
      %s195 = scalar_select %p192, %s193, %s194
      %p198 = pneg %p192
      %p199 = scmp.eq.s32.totalorder %s26, 3
      %p200 = por %p198, %p199
      %p201 = scmp.ne.s32.totalorder %s193, %s196
      %p202 = scmp.eq.s32.totalorder %s26, 0
      %p203 = por %p201, %p202
      %p204 = scmp.ne.s32.totalorder %s193, %s196
      %p205 = scmp.eq.s32.totalorder %s31, 3
      %p206 = por %p204, %p205
      %p207 = scmp.ne.s32.totalorder %s196, %s197
      %p208 = scmp.eq.s32.totalorder %s31, 0
      %p209 = por %p207, %p208
      %p210 = scmp.ne.s32.totalorder %s196, %s197
      %p211 = scmp.eq.s32.totalorder %s32, 3
      %p212 = por %p210, %p211
      %p214 = scmp.ne.s32.totalorder %s197, %s213
      %p215 = scmp.eq.s32.totalorder %s32, 0
      %p216 = por %p214, %p215
      %s217 = ssub.s32 %s26, %s33
      %p218 = scmp.eq.s32.totalorder %s217, 0
      %s220 = sadd.s32 %s219, 1
      %s221 = scalar_select %p218, %s219, %s220
      %p224 = pneg %p218
      %p225 = scmp.eq.s32.totalorder %s26, 3
      %p226 = por %p224, %p225
      %p227 = scmp.ne.s32.totalorder %s219, %s222
      %p228 = scmp.eq.s32.totalorder %s26, 0
      %p229 = por %p227, %p228
      %p230 = scmp.ne.s32.totalorder %s219, %s222
      %p231 = scmp.eq.s32.totalorder %s31, 3
      %p232 = por %p230, %p231
      %p233 = scmp.ne.s32.totalorder %s222, %s223
      %p234 = scmp.eq.s32.totalorder %s31, 0
      %p235 = por %p233, %p234
      %p236 = scmp.ne.s32.totalorder %s222, %s223
      %p237 = scmp.eq.s32.totalorder %s32, 3
      %p238 = por %p236, %p237
      %p240 = scmp.ne.s32.totalorder %s223, %s239
      %p241 = scmp.eq.s32.totalorder %s32, 0
      %p242 = por %p240, %p241
      %p243 = scmp.le.s32.totalorder 1, %s26
      %p244 = scmp.lt.s32.totalorder %s26, 5
      %p245 = pnand %p243, %p244
      %p246 = pneg %p245
      // Predicated region
      $region9: #{tpu_custom_call.1} parent=5 // pred_check
        _
      $region10: #{tpu_custom_call.1} parent=5 // pred_check_branch
        %248 = sbr.rel (%p245) target = $region12
      $region11: #{tpu_custom_call.1} parent=5 // pred_region
        %s249 = ssub.s32 %s26, 1
        // Predicated region
        $region13: #{tpu_custom_call.1} parent=11 // pred_check
          %p250 = pneg %p73
        $region14: #{tpu_custom_call.1} parent=11 // pred_check_branch
          %252 = sbr.rel (%p250) target = $region16
        $region15: #{tpu_custom_call.1} parent=11 // pred_region
          _
        $region16: #{tpu_custom_call.1} parent=11 // pred_fallthru
          _
        // Predicated region
        $region17: #{tpu_custom_call.1} parent=11 // pred_check
          %p253 = pneg %p94
        $region18: #{tpu_custom_call.1} parent=11 // pred_check_branch
          %255 = sbr.rel (%p253) target = $region20
        $region19: #{tpu_custom_call.1} parent=11 // pred_region
          _
        $region20: #{tpu_custom_call.1} parent=11 // pred_fallthru
          _
        // Predicated region
        $region21: #{tpu_custom_call.1} parent=11 // pred_check
          %p256 = pneg %p115
        $region22: #{tpu_custom_call.1} parent=11 // pred_check_branch
          %258 = sbr.rel (%p256) target = $region24
        $region23: #{tpu_custom_call.1} parent=11 // pred_region
          %s260 = ssub.s32 512, 512
          %261 = vsyncadd [#allocation6], %s260
          %s262 = sshll.u32 [#allocation5], 4
          %s263 = int_to_ptr.vmem [resolvable:$true] %s262
          %268 = dma.hbm_to_vmem [thread:$0]  %s3, 512, %s263, [#allocation6], 128, 128, 8
        $region24: #{tpu_custom_call.1} parent=11 // pred_fallthru
          _
        // Predicated region
        $region25: #{tpu_custom_call.1} parent=11 // pred_check
          %p269 = pneg %p136
        $region26: #{tpu_custom_call.1} parent=11 // pred_check_branch
          %271 = sbr.rel (%p269) target = $region28
        $region27: #{tpu_custom_call.1} parent=11 // pred_region
          %s273 = ssub.s32 512, 512
          %274 = vsyncadd [#allocation6], %s273
          %s275 = sshll.u32 [#allocation7], 4
          %s276 = int_to_ptr.vmem [resolvable:$true] %s275
          %281 = dma.hbm_to_vmem [thread:$0]  %s4, 512, %s276, [#allocation6], 128, 128, 8
        $region28: #{tpu_custom_call.1} parent=11 // pred_fallthru
          _
        // Predicated region
        $region29: #{tpu_custom_call.1} parent=11 // pred_check
          %p282 = pneg %p157
        $region30: #{tpu_custom_call.1} parent=11 // pred_check_branch
          %284 = sbr.rel (%p282) target = $region32
        $region31: #{tpu_custom_call.1} parent=11 // pred_region
          %s286 = ssub.s32 512, 512
          %287 = vsyncadd [#allocation9], %s286
          %s288 = sshll.u32 [#allocation8], 4
          %s289 = int_to_ptr.vmem [resolvable:$true] %s288
          %294 = dma.hbm_to_vmem [thread:$0]  %s5, 512, %s289, [#allocation9], 128, 128, 8
        $region32: #{tpu_custom_call.1} parent=11 // pred_fallthru
          _
      $region12: #{tpu_custom_call.1} parent=5 // pred_fallthru
        _
      %p295 = scmp.lt.s32.totalorder %s26, 4
      // Predicated region
      $region33: #{tpu_custom_call.1} parent=5 // pred_check
        %p296 = pneg %p295
      $region34: #{tpu_custom_call.1} parent=5 // pred_check_branch
        %298 = sbr.rel (%p296) target = $region36
      $region35: #{tpu_custom_call.1} parent=5 // pred_region
        // Predicated region
        $region37: #{tpu_custom_call.1} parent=35 // pred_check
          %p299 = pneg %p46
        $region38: #{tpu_custom_call.1} parent=35 // pred_check_branch
          %301 = sbr.rel (%p299) target = $region40
        $region39: #{tpu_custom_call.1} parent=35 // pred_region
          %s302 = sand.u32 %s36, 1
          %s303 = scalar_lea.sflag [#allocation3], %s302
          %s304 = sand.u32 %s36, 1
          %s305 = smul.addr %s304, 8
          %s306 = scalar_lea.vmem [#allocation2], %s305
          %s308 = ssub.s32 128, 128
          %309 = vsyncadd %s303, %s308
          %s310 = smul.addr %s26, 128
          %s311 = scalar_lea.hbm %s0, %s310
          %s313 = sshll.u32 %s306, 4
          %s314 = int_to_ptr.vmem [resolvable:$true] %s313
          %316 = dma.hbm_to_vmem [thread:$0]  %s311, 128, %s314, %s303
        $region40: #{tpu_custom_call.1} parent=35 // pred_fallthru
          _
      $region36: #{tpu_custom_call.1} parent=5 // pred_fallthru
        _
      %p317 = scmp.le.s32.totalorder 1, %s26
      %p318 = scmp.lt.s32.totalorder %s26, 5
      %p319 = pnand %p317, %p318
      %p320 = pneg %p319
      // Predicated region
      $region41: #{tpu_custom_call.1} parent=5 // pred_check
        _
      $region42: #{tpu_custom_call.1} parent=5 // pred_check_branch
        %322 = sbr.rel (%p319) target = $region44
      $region43: #{tpu_custom_call.1} parent=5 // pred_region
        %s323 = ssub.s32 %s26, 1
        %s324 = sand.u32 %s39, 1
        %s325 = scalar_lea.sflag [#allocation3], %s324
        %s326 = sand.u32 %s39, 1
        %s327 = smul.addr %s326, 8
        %s328 = scalar_lea.vmem [#allocation2], %s327
        // Predicated region
        $region45: #{tpu_custom_call.1} parent=43 // pred_check
          %p329 = pneg %p52
        $region46: #{tpu_custom_call.1} parent=43 // pred_check_branch
          %331 = sbr.rel (%p329) target = $region48
        $region47: #{tpu_custom_call.1} parent=43 // pred_region
          %332 = dma.done %s325, 128
        $region48: #{tpu_custom_call.1} parent=43 // pred_fallthru
          _
        // Predicated region
        $region49: #{tpu_custom_call.1} parent=43 // pred_check
          %p333 = pneg %p115
        $region50: #{tpu_custom_call.1} parent=43 // pred_check_branch
          %335 = sbr.rel (%p333) target = $region52
        $region51: #{tpu_custom_call.1} parent=43 // pred_region
          %336 = dma.done [#allocation6], 512
        $region52: #{tpu_custom_call.1} parent=43 // pred_fallthru
          _
        // Predicated region
        $region53: #{tpu_custom_call.1} parent=43 // pred_check
          %p337 = pneg %p136
        $region54: #{tpu_custom_call.1} parent=43 // pred_check_branch
          %339 = sbr.rel (%p337) target = $region56
        $region55: #{tpu_custom_call.1} parent=43 // pred_region
          %340 = dma.done [#allocation6], 512
        $region56: #{tpu_custom_call.1} parent=43 // pred_fallthru
          _
        // Predicated region
        $region57: #{tpu_custom_call.1} parent=43 // pred_check
          %p341 = pneg %p157
        $region58: #{tpu_custom_call.1} parent=43 // pred_check_branch
          %343 = sbr.rel (%p341) target = $region60
        $region59: #{tpu_custom_call.1} parent=43 // pred_region
          %344 = dma.done [#allocation9], 512
        $region60: #{tpu_custom_call.1} parent=43 // pred_fallthru
          _
        %s345 = sand.u32 %s39, 1
        %s346 = scalar_lea.sflag [#allocation3], %s345
        %s347 = sand.u32 %s39, 1
        %s348 = smul.addr %s347, 8
        %s349 = scalar_lea.vmem [#allocation2], %s348
        %p350 = pneg %p52
        %p351 = pneg %p49
        %p352 = pneg %p73
        %p353 = pneg %p70
        %p354 = pneg %p94
        %p355 = pneg %p91
        %p356 = pneg %p115
        %p357 = pneg %p112
        %p358 = pneg %p136
        %p359 = pneg %p133
        %p360 = pneg %p157
        %p361 = pneg %p154
        %p362 = pneg %p183
        %p363 = pneg %p180
        %s364 = sand.u32 %s170, 1
        %s365 = scalar_lea.sflag [#allocation4], %s364
        %s366 = sand.u32 %s170, 1
        %s367 = smul.addr %s366, 8
        %s368 = scalar_lea.vmem [#allocation10], %s367
        %p369 = pneg %p209
        %p370 = pneg %p206
        %s371 = sand.u32 %s31, 1
        %s372 = scalar_lea.sflag [#allocation12], %s371
        %s373 = sand.u32 %s196, 1
        %s374 = smul.addr %s373, 8
        %s375 = scalar_lea.vmem [#allocation11], %s374
        %p376 = pneg %p235
        %p377 = pneg %p232
        %s378 = sand.u32 %s31, 1
        %s379 = scalar_lea.sflag [#allocation12], %s378
        %s380 = sand.u32 %s222, 1
        %s381 = smul.addr %s380, 8
        %s382 = scalar_lea.vmem [#allocation13], %s381
        %v383 = vld [vmem:[%s328] sm:$0xff]
        %v384 = vld [vmem:[%s1] sm:$0x1]
        %v385 = vld [vmem:[%s2] sm:$0x1]
        %vm386 = vcmask 261120
        %v387 = vsel %vm386, %v383, 0.0
        %388 = vadd.xlane.f32.xlu0 %v387
        %v389 = vpop.xlane.xlu0 %388
        %v390 = vrcp.pop 32.0
        %v391 = vmul.f32 %v389, %v390
        %v392 = vsub.f32 %v383, %v391
        %v393 = vmul.f32 %v392, %v392
        %v394 = vsel %vm386, %v393, 0.0
        %395 = vadd.xlane.f32.xlu0 %v394
        %v396 = vpop.xlane.xlu0 %395
        %v397 = vmul.f32 %v396, %v390
        %v398 = vadd.f32 %v397, 1e-05
        %v399 = vrsqrt.pop %v398
        %v400 = vmul.f32 %v392, %v399
        %v402 = vlaneseq
        %v403 = vshrl.u32 %v402, 7
        %v404 = vsub.s32 0, %v403
        %v405 = vrot.slane %v384, %v404
        %v407 = vmul.f32 %v400, %v405
        %v409 = vlaneseq
        %v410 = vshrl.u32 %v409, 7
        %v411 = vsub.s32 0, %v410
        %v412 = vrot.slane %v385, %v411
        %v414 = vadd.f32 %v407, %v412
        %v415 = vld [vmem:[#allocation5] sm:$0xff]
        %v416 = vld [vmem:[#allocation5 + $0x8] sm:$0xff]
        %v417 = vld [vmem:[#allocation5 + $0x10] sm:$0xff]
        %v418 = vld [vmem:[#allocation5 + $0x18] sm:$0xff]
        %v420 = vsel %vm386, %v414, 0
        %422 = vmatprep.subr.mxu0 0.0
        %423 = vmatpush1.msra.mxu0 0.0
        %424 = vmatprep.subr.mxu0 0.0
        %425 = vmatpush1.msra.mxu0 0.0
        %426 = vmatprep.subr.mxu0 0.0
        %427 = vmatpush1.msra.mxu0 0.0
        %428 = vmatprep.subr.mxu0 0.0
        %429 = vmatpush1.msra.mxu0 0.0
        %430 = vmatprep.subr.mxu0 0.0
        %431 = vmatpush1.msra.mxu0 0.0
        %432 = vmatprep.subr.mxu0 0.0
        %433 = vmatpush1.msra.mxu0 0.0
        %434 = vmatprep.subr.mxu0 0.0
        %435 = vmatpush1.msra.mxu0 0.0
        %436 = vmatprep.subr.mxu0 0.0
        %437 = vmatpush1.msra.mxu0 0.0
        %438 = vmatprep.subr.mxu0 0.0
        %439 = vmatpush1.msra.mxu0 0.0
        %440 = vmatprep.subr.mxu0 0.0
        %441 = vmatpush1.msra.mxu0 0.0
        %442 = vmatprep.subr.mxu0 0.0
        %443 = vmatpush1.msra.mxu0 0.0
        %444 = vmatprep.subr.mxu0 0.0
        %445 = vmatpush1.msra.mxu0 0.0
        %446 = vmatprep.subr.mxu0 0.0
        %447 = vmatpush1.msra.mxu0 %v418
        %448 = vmatprep.subr.mxu0 0.0
        %449 = vmatpush1.msra.mxu0 %v417
        %450 = vmatprep.subr.mxu0 0.0
        %451 = vmatpush1.msra.mxu0 %v416
        %452 = vmatprep.subr.mxu0 0.0
        %453 = vmatpush1.msra.mxu0 %v415
        %454 = vmatprep.subr.mxu0 0.0
        %455 = vmatpush2.msra.mxu0 0.0
        %456 = vmatprep.subr.mxu0 0.0
        %457 = vmatpush2.msra.mxu0 0.0
        %458 = vmatprep.subr.mxu0 0.0
        %459 = vmatpush2.msra.mxu0 0.0
        %460 = vmatprep.subr.mxu0 0.0
        %461 = vmatpush2.msra.mxu0 0.0
        %462 = vmatprep.subr.mxu0 0.0
        %463 = vmatpush2.msra.mxu0 0.0
        %464 = vmatprep.subr.mxu0 0.0
        %465 = vmatpush2.msra.mxu0 0.0
        %466 = vmatprep.subr.mxu0 0.0
        %467 = vmatpush2.msra.mxu0 0.0
        %468 = vmatprep.subr.mxu0 0.0
        %469 = vmatpush2.msra.mxu0 0.0
        %470 = vmatprep.subr.mxu0 0.0
        %471 = vmatpush2.msra.mxu0 0.0
        %472 = vmatprep.subr.mxu0 0.0
        %473 = vmatpush2.msra.mxu0 0.0
        %474 = vmatprep.subr.mxu0 0.0
        %475 = vmatpush2.msra.mxu0 0.0
        %476 = vmatprep.subr.mxu0 0.0
        %477 = vmatpush2.msra.mxu0 0.0
        %478 = vmatprep.subr.mxu0 0.0
        %479 = vmatpush2.msra.mxu0 0.0
        %480 = vmatprep.subr.mxu0 0.0
        %481 = vmatpush2.msra.mxu0 0.0
        %482 = vmatprep.subr.mxu0 0.0
        %483 = vmatpush2.msra.mxu0 0.0
        %484 = vmatprep.subr.mxu0 0.0
        %485 = vmatpush2.msra.mxu0 0.0
        %486 = vmatprep.mubr.f32.mxu0 0.0
        %487 = vmatmul.mubr.f32.gmra.mxu0 %v420
        %v488 = vpop.f32.mrf.mxu0
        %v489 = vadd.f32 0.0, %v488
        %v490 = vpop.f32.mrf.mxu0
        %491 = vdwg.mxu0
        %492 = vst.msk [vmem:[%s368] sm:$0xff] %vm386, %v489
        %v493 = vld [vmem:[#allocation7] sm:$0xff]
        %v494 = vld [vmem:[#allocation7 + $0x8] sm:$0xff]
        %v495 = vld [vmem:[#allocation7 + $0x10] sm:$0xff]
        %v496 = vld [vmem:[#allocation7 + $0x18] sm:$0xff]
        %497 = vmatprep.subr.mxu0 0.0
        %498 = vmatpush1.msra.mxu0 0.0
        %499 = vmatprep.subr.mxu0 0.0
        %500 = vmatpush1.msra.mxu0 0.0
        %501 = vmatprep.subr.mxu0 0.0
        %502 = vmatpush1.msra.mxu0 0.0
        %503 = vmatprep.subr.mxu0 0.0
        %504 = vmatpush1.msra.mxu0 0.0
        %505 = vmatprep.subr.mxu0 0.0
        %506 = vmatpush1.msra.mxu0 0.0
        %507 = vmatprep.subr.mxu0 0.0
        %508 = vmatpush1.msra.mxu0 0.0
        %509 = vmatprep.subr.mxu0 0.0
        %510 = vmatpush1.msra.mxu0 0.0
        %511 = vmatprep.subr.mxu0 0.0
        %512 = vmatpush1.msra.mxu0 0.0
        %513 = vmatprep.subr.mxu0 0.0
        %514 = vmatpush1.msra.mxu0 0.0
        %515 = vmatprep.subr.mxu0 0.0
        %516 = vmatpush1.msra.mxu0 0.0
        %517 = vmatprep.subr.mxu0 0.0
        %518 = vmatpush1.msra.mxu0 0.0
        %519 = vmatprep.subr.mxu0 0.0
        %520 = vmatpush1.msra.mxu0 0.0
        %521 = vmatprep.subr.mxu0 0.0
        %522 = vmatpush1.msra.mxu0 %v496
        %523 = vmatprep.subr.mxu0 0.0
        %524 = vmatpush1.msra.mxu0 %v495
        %525 = vmatprep.subr.mxu0 0.0
        %526 = vmatpush1.msra.mxu0 %v494
        %527 = vmatprep.subr.mxu0 0.0
        %528 = vmatpush1.msra.mxu0 %v493
        %529 = vmatprep.subr.mxu0 0.0
        %530 = vmatpush2.msra.mxu0 0.0
        %531 = vmatprep.subr.mxu0 0.0
        %532 = vmatpush2.msra.mxu0 0.0
        %533 = vmatprep.subr.mxu0 0.0
        %534 = vmatpush2.msra.mxu0 0.0
        %535 = vmatprep.subr.mxu0 0.0
        %536 = vmatpush2.msra.mxu0 0.0
        %537 = vmatprep.subr.mxu0 0.0
        %538 = vmatpush2.msra.mxu0 0.0
        %539 = vmatprep.subr.mxu0 0.0
        %540 = vmatpush2.msra.mxu0 0.0
        %541 = vmatprep.subr.mxu0 0.0
        %542 = vmatpush2.msra.mxu0 0.0
        %543 = vmatprep.subr.mxu0 0.0
        %544 = vmatpush2.msra.mxu0 0.0
        %545 = vmatprep.subr.mxu0 0.0
        %546 = vmatpush2.msra.mxu0 0.0
        %547 = vmatprep.subr.mxu0 0.0
        %548 = vmatpush2.msra.mxu0 0.0
        %549 = vmatprep.subr.mxu0 0.0
        %550 = vmatpush2.msra.mxu0 0.0
        %551 = vmatprep.subr.mxu0 0.0
        %552 = vmatpush2.msra.mxu0 0.0
        %553 = vmatprep.subr.mxu0 0.0
        %554 = vmatpush2.msra.mxu0 0.0
        %555 = vmatprep.subr.mxu0 0.0
        %556 = vmatpush2.msra.mxu0 0.0
        %557 = vmatprep.subr.mxu0 0.0
        %558 = vmatpush2.msra.mxu0 0.0
        %559 = vmatprep.subr.mxu0 0.0
        %560 = vmatpush2.msra.mxu0 0.0
        %561 = vmatprep.mubr.f32.mxu0 0.0
        %562 = vmatmul.mubr.f32.gmra.mxu0 %v420
        %v563 = vpop.f32.mrf.mxu0
        %v564 = vadd.f32 0.0, %v563
        %v565 = vpop.f32.mrf.mxu0
        %566 = vdwg.mxu0
        %567 = vst.msk [vmem:[%s375] sm:$0xff] %vm386, %v564
        %v568 = vld [vmem:[#allocation8] sm:$0xff]
        %v569 = vld [vmem:[#allocation8 + $0x8] sm:$0xff]
        %v570 = vld [vmem:[#allocation8 + $0x10] sm:$0xff]
        %v571 = vld [vmem:[#allocation8 + $0x18] sm:$0xff]
        %572 = vmatprep.subr.mxu0 0.0
        %573 = vmatpush1.msra.mxu0 0.0
        %574 = vmatprep.subr.mxu0 0.0
        %575 = vmatpush1.msra.mxu0 0.0
        %576 = vmatprep.subr.mxu0 0.0
        %577 = vmatpush1.msra.mxu0 0.0
        %578 = vmatprep.subr.mxu0 0.0
        %579 = vmatpush1.msra.mxu0 0.0
        %580 = vmatprep.subr.mxu0 0.0
        %581 = vmatpush1.msra.mxu0 0.0
        %582 = vmatprep.subr.mxu0 0.0
        %583 = vmatpush1.msra.mxu0 0.0
        %584 = vmatprep.subr.mxu0 0.0
        %585 = vmatpush1.msra.mxu0 0.0
        %586 = vmatprep.subr.mxu0 0.0
        %587 = vmatpush1.msra.mxu0 0.0
        %588 = vmatprep.subr.mxu0 0.0
        %589 = vmatpush1.msra.mxu0 0.0
        %590 = vmatprep.subr.mxu0 0.0
        %591 = vmatpush1.msra.mxu0 0.0
        %592 = vmatprep.subr.mxu0 0.0
        %593 = vmatpush1.msra.mxu0 0.0
        %594 = vmatprep.subr.mxu0 0.0
        %595 = vmatpush1.msra.mxu0 0.0
        %596 = vmatprep.subr.mxu0 0.0
        %597 = vmatpush1.msra.mxu0 %v571
        %598 = vmatprep.subr.mxu0 0.0
        %599 = vmatpush1.msra.mxu0 %v570
        %600 = vmatprep.subr.mxu0 0.0
        %601 = vmatpush1.msra.mxu0 %v569
        %602 = vmatprep.subr.mxu0 0.0
        %603 = vmatpush1.msra.mxu0 %v568
        %604 = vmatprep.subr.mxu0 0.0
        %605 = vmatpush2.msra.mxu0 0.0
        %606 = vmatprep.subr.mxu0 0.0
        %607 = vmatpush2.msra.mxu0 0.0
        %608 = vmatprep.subr.mxu0 0.0
        %609 = vmatpush2.msra.mxu0 0.0
        %610 = vmatprep.subr.mxu0 0.0
        %611 = vmatpush2.msra.mxu0 0.0
        %612 = vmatprep.subr.mxu0 0.0
        %613 = vmatpush2.msra.mxu0 0.0
        %614 = vmatprep.subr.mxu0 0.0
        %615 = vmatpush2.msra.mxu0 0.0
        %616 = vmatprep.subr.mxu0 0.0
        %617 = vmatpush2.msra.mxu0 0.0
        %618 = vmatprep.subr.mxu0 0.0
        %619 = vmatpush2.msra.mxu0 0.0
        %620 = vmatprep.subr.mxu0 0.0
        %621 = vmatpush2.msra.mxu0 0.0
        %622 = vmatprep.subr.mxu0 0.0
        %623 = vmatpush2.msra.mxu0 0.0
        %624 = vmatprep.subr.mxu0 0.0
        %625 = vmatpush2.msra.mxu0 0.0
        %626 = vmatprep.subr.mxu0 0.0
        %627 = vmatpush2.msra.mxu0 0.0
        %628 = vmatprep.subr.mxu0 0.0
        %629 = vmatpush2.msra.mxu0 0.0
        %630 = vmatprep.subr.mxu0 0.0
        %631 = vmatpush2.msra.mxu0 0.0
        %632 = vmatprep.subr.mxu0 0.0
        %633 = vmatpush2.msra.mxu0 0.0
        %634 = vmatprep.subr.mxu0 0.0
        %635 = vmatpush2.msra.mxu0 0.0
        %636 = vmatprep.mubr.f32.mxu0 0.0
        %637 = vmatmul.mubr.f32.gmra.mxu0 %v420
        %v638 = vpop.f32.mrf.mxu0
        %v639 = vadd.f32 0.0, %v638
        %v640 = vpop.f32.mrf.mxu0
        %641 = vdwg.mxu0
        %642 = vst.msk [vmem:[%s382] sm:$0xff] %vm386, %v639
        %s643 = sand.u32 %s170, 1
        %s644 = scalar_lea.sflag [#allocation4], %s643
        %s645 = sand.u32 %s170, 1
        %s646 = smul.addr %s645, 8
        %s647 = scalar_lea.vmem [#allocation10], %s646
        %s648 = sand.u32 %s31, 1
        %s649 = scalar_lea.sflag [#allocation12], %s648
        %s650 = sand.u32 %s196, 1
        %s651 = smul.addr %s650, 8
        %s652 = scalar_lea.vmem [#allocation11], %s651
        %s653 = sand.u32 %s31, 1
        %s654 = scalar_lea.sflag [#allocation12], %s653
        %s655 = sand.u32 %s222, 1
        %s656 = smul.addr %s655, 8
        %s657 = scalar_lea.vmem [#allocation13], %s656
        // Predicated region
        $region61: #{tpu_custom_call.1} parent=43 // pred_check
          %p658 = pneg %p180
        $region62: #{tpu_custom_call.1} parent=43 // pred_check_branch
          %660 = sbr.rel (%p658) target = $region64
        $region63: #{tpu_custom_call.1} parent=43 // pred_region
          %s662 = ssub.s32 128, 128
          %663 = vsyncadd %s644, %s662
          %s664 = smul.addr %s31, 128
          %s665 = scalar_lea.hbm %s6, %s664
          %s667 = sshll.u32 %s647, 4
          %s668 = int_to_ptr.vmem [resolvable:$true] %s667
          %670 = dma.vmem_to_hbm [thread:$0]  %s668, 128, %s665, %s644
        $region64: #{tpu_custom_call.1} parent=43 // pred_fallthru
          _
        // Predicated region
        $region65: #{tpu_custom_call.1} parent=43 // pred_check
          %p671 = pneg %p206
        $region66: #{tpu_custom_call.1} parent=43 // pred_check_branch
          %673 = sbr.rel (%p671) target = $region68
        $region67: #{tpu_custom_call.1} parent=43 // pred_region
          %s675 = ssub.s32 128, 128
          %676 = vsyncadd %s649, %s675
          %s677 = smul.addr %s31, 128
          %s678 = scalar_lea.hbm %s7, %s677
          %s680 = sshll.u32 %s652, 4
          %s681 = int_to_ptr.vmem [resolvable:$true] %s680
          %683 = dma.vmem_to_hbm [thread:$0]  %s681, 128, %s678, %s649
        $region68: #{tpu_custom_call.1} parent=43 // pred_fallthru
          _
        // Predicated region
        $region69: #{tpu_custom_call.1} parent=43 // pred_check
          %p684 = pneg %p232
        $region70: #{tpu_custom_call.1} parent=43 // pred_check_branch
          %686 = sbr.rel (%p684) target = $region72
        $region71: #{tpu_custom_call.1} parent=43 // pred_region
          %s688 = ssub.s32 128, 128
          %689 = vsyncadd %s654, %s688
          %s690 = smul.addr %s31, 128
          %s691 = scalar_lea.hbm %s8, %s690
          %s693 = sshll.u32 %s657, 4
          %s694 = int_to_ptr.vmem [resolvable:$true] %s693
          %696 = dma.vmem_to_hbm [thread:$0]  %s694, 128, %s691, %s654
        $region72: #{tpu_custom_call.1} parent=43 // pred_fallthru
          _
      $region44: #{tpu_custom_call.1} parent=5 // pred_fallthru
        _
      %p697 = scmp.le.s32.totalorder 2, %s26
      // Predicated region
      $region73: #{tpu_custom_call.1} parent=5 // pred_check
        %p698 = pneg %p697
      $region74: #{tpu_custom_call.1} parent=5 // pred_check_branch
        %700 = sbr.rel (%p698) target = $region76
      $region75: #{tpu_custom_call.1} parent=5 // pred_region
        %s701 = ssub.s32 %s26, 2
        // Predicated region
        $region77: #{tpu_custom_call.1} parent=75 // pred_check
          %p702 = pneg %p186
        $region78: #{tpu_custom_call.1} parent=75 // pred_check_branch
          %704 = sbr.rel (%p702) target = $region80
        $region79: #{tpu_custom_call.1} parent=75 // pred_region
          %s705 = sand.u32 %s171, 1
          %s706 = scalar_lea.sflag [#allocation4], %s705
          %s707 = sand.u32 %s171, 1
          %s708 = smul.addr %s707, 8
          %s709 = scalar_lea.vmem [#allocation10], %s708
          %710 = dma.done %s706, 128
        $region80: #{tpu_custom_call.1} parent=75 // pred_fallthru
          _
        // Predicated region
        $region81: #{tpu_custom_call.1} parent=75 // pred_check
          %p711 = pneg %p212
        $region82: #{tpu_custom_call.1} parent=75 // pred_check_branch
          %713 = sbr.rel (%p711) target = $region84
        $region83: #{tpu_custom_call.1} parent=75 // pred_region
          %s714 = sand.u32 %s32, 1
          %s715 = scalar_lea.sflag [#allocation12], %s714
          %s716 = sand.u32 %s197, 1
          %s717 = smul.addr %s716, 8
          %s718 = scalar_lea.vmem [#allocation11], %s717
          %719 = dma.done %s715, 128
        $region84: #{tpu_custom_call.1} parent=75 // pred_fallthru
          _
        // Predicated region
        $region85: #{tpu_custom_call.1} parent=75 // pred_check
          %p720 = pneg %p238
        $region86: #{tpu_custom_call.1} parent=75 // pred_check_branch
          %722 = sbr.rel (%p720) target = $region88
        $region87: #{tpu_custom_call.1} parent=75 // pred_region
          %s723 = sand.u32 %s32, 1
          %s724 = scalar_lea.sflag [#allocation12], %s723
          %s725 = sand.u32 %s223, 1
          %s726 = smul.addr %s725, 8
          %s727 = scalar_lea.vmem [#allocation13], %s726
          %728 = dma.done %s724, 128
        $region88: #{tpu_custom_call.1} parent=75 // pred_fallthru
          _
      $region76: #{tpu_custom_call.1} parent=5 // pred_fallthru
        _
    $region6: #{tpu_custom_call.1} parent=1 // loop_footer
      %s30 = sadd.s32 1, %s26
    $region7: #{tpu_custom_call.1} parent=1 // loop_footer_branch
      %25 = sbr.rel target = $region3
    $region8: #{tpu_custom_call.1} parent=1 // loop_exit
      _
    %729 = vsyncpa [#allocation3], 1
    %s730 = scalar_lea.sflag [#allocation3], 1
    %731 = vsyncpa %s730, 1
    %732 = vsyncpa [#allocation6], 1
    %733 = vsyncpa [#allocation9], 1
    %734 = vsyncpa [#allocation4], 1
    %s735 = scalar_lea.sflag [#allocation4], 1
    %736 = vsyncpa %s735, 1
    %737 = vsyncpa [#allocation12], 1
    %s738 = scalar_lea.sflag [#allocation12], 1
    %739 = vsyncpa %s738, 1

// kernel: tpu_custom_call.1
$region0: #{tpu_custom_call.1}
  #allocation0 [shape = 'u32[]', space=smem, size = 0x4, offset = 0x4, fixed_abs, tag = 'smem constant byte address 0x4 - core index']
  #allocation1 [shape = 'u32[144,128]{1,0:T(1,128)}', space=vmem, size = 0x12000, scoped, tag = 'internal scratch']
  %s0 = inlined_call_operand.hbm [shape: f32[32,32], index: 0, kind: input, shape index: {}]
  %s1 = inlined_call_operand.vmem [shape: f32[1,32], index: 1, kind: input, shape index: {}]
  %s2 = inlined_call_operand.vmem [shape: f32[1,32], index: 2, kind: input, shape index: {}]
  %s3 = inlined_call_operand.hbm [shape: f32[32,32], index: 3, kind: input, shape index: {}]
  %s4 = inlined_call_operand.hbm [shape: f32[32,32], index: 4, kind: input, shape index: {}]
  %s5 = inlined_call_operand.hbm [shape: f32[32,32], index: 5, kind: input, shape index: {}]
  %s6 = inlined_call_operand.hbm [shape: f32[32,32], index: 6, kind: output, shape index: {0}]
  %s7 = inlined_call_operand.hbm [shape: f32[32,32], index: 7, kind: output, shape index: {1}]
  %s8 = inlined_call_operand.hbm [shape: f32[32,32], index: 8, kind: output, shape index: {2}]
  %9 = xla_tuple %s6, %s7, %s8
  %s10 = sld [smem:[#allocation0]]
  $region89: #{tpu_custom_call.1} parent=0
    _
  %s12 = ssub.s32 1, %s10
  %s13 = scalar_select 0, %s12, %s10
  $region1: #{tpu_custom_call.1} parent=0
    #allocation2 [shape = 'u8[8192]{0}', space=vmem, size = 0x2000, scoped, tag = 'input window, operand 0']
    #allocation3 [shape = 's32[2]{0}', space=sflag, size = 0x8, scoped, tag = 'scoped memory for tpu_custom_call.1']
    #allocation4 [shape = 's32[2]{0}', space=sflag, size = 0x8, scoped, tag = 'scoped memory for tpu_custom_call.1']
    #allocation5 [shape = 'u8[16384]{0}', space=vmem, size = 0x4000, scoped, tag = 'input window, operand 3, single buffered']
    #allocation6 [shape = 's32[1]{0}', space=sflag, size = 0x4, scoped, tag = 'scoped memory for tpu_custom_call.1']
    #allocation7 [shape = 'u8[16384]{0}', space=vmem, size = 0x4000, scoped, tag = 'input window, operand 4, single buffered']
    #allocation8 [shape = 'u8[16384]{0}', space=vmem, size = 0x4000, scoped, tag = 'input window, operand 5, single buffered']
    #allocation9 [shape = 's32[1]{0}', space=sflag, size = 0x4, scoped, tag = 'scoped memory for tpu_custom_call.1']
    #allocation10 [shape = 'u8[8192]{0}', space=vmem, size = 0x2000, scoped, tag = 'output window, operand 0']
    #allocation11 [shape = 'u8[8192]{0}', space=vmem, size = 0x2000, scoped, tag = 'output window, operand 1']
    #allocation12 [shape = 's32[2]{0}', space=sflag, size = 0x8, scoped, tag = 'scoped memory for tpu_custom_call.1']
    #allocation13 [shape = 'u8[8192]{0}', space=vmem, size = 0x2000, scoped, tag = 'output window, operand 2']
    %14 = vsyncpa [#allocation3], 0
    %s15 = scalar_lea.sflag [#allocation3], 1
    %16 = vsyncpa %s15, 0
    %17 = vsyncpa [#allocation6], 0
    %18 = vsyncpa [#allocation9], 0
    %19 = vsyncpa [#allocation4], 0
    %s20 = scalar_lea.sflag [#allocation4], 1
    %21 = vsyncpa %s20, 0
    %22 = vsyncpa [#allocation12], 0
    %s23 = scalar_lea.sflag [#allocation12], 1
    %24 = vsyncpa %s23, 0
    loop: start=0, step=1, limit=6
    $region2: #{tpu_custom_call.1} parent=1 // loop_pre_header
      _
    $region3: #{tpu_custom_call.1} parent=1 // loop_header
      %s26 = sphi 0, %s30
      %p27 = scmp.ge.s32.totalorder %s26, 6
      %s36 = sphi 0, %s38
      %s39 = sphi 0, %s36
      %s40 = sphi 0, %s39
      %s56 = sphi 0, %s40
      %s60 = sphi 0, %s60
      %s62 = sphi 0, %s60
      %s63 = sphi 0, %s62
      %s77 = sphi 0, %s63
      %s81 = sphi 0, %s81
      %s83 = sphi 0, %s81
      %s84 = sphi 0, %s83
      %s98 = sphi 0, %s84
      %s102 = sphi 0, %s102
      %s104 = sphi 0, %s102
      %s105 = sphi 0, %s104
      %s119 = sphi 0, %s105
      %s123 = sphi 0, %s123
      %s125 = sphi 0, %s123
      %s126 = sphi 0, %s125
      %s140 = sphi 0, %s126
      %s144 = sphi 0, %s144
      %s146 = sphi 0, %s144
      %s147 = sphi 0, %s146
      %s161 = sphi 0, %s147
      %s167 = sphi 0, %s169
      %s170 = sphi 0, %s167
      %s171 = sphi 0, %s170
      %s187 = sphi 0, %s171
      %s193 = sphi 0, %s195
      %s196 = sphi 0, %s193
      %s197 = sphi 0, %s196
      %s213 = sphi 0, %s197
      %s219 = sphi 0, %s221
      %s222 = sphi 0, %s219
      %s223 = sphi 0, %s222
      %s239 = sphi 0, %s223
    $region4: #{tpu_custom_call.1} parent=1 // loop_header_branch
      %29 = sbr.rel (%p27) target = $region8
    $region5: #{tpu_custom_call.1} parent=1 // loop_body
      %s31 = ssub.s32 %s26, 1
      %s32 = ssub.s32 %s26, 2
      %s33 = sadd.s32 %s26, 1
      %s34 = ssub.s32 %s26, %s33
      %p35 = scmp.eq.s32.totalorder %s34, 0
      %s37 = sadd.s32 %s36, 1
      %s38 = scalar_select %p35, %s36, %s37
      %p41 = pneg %p35
      %p42 = scmp.eq.s32.totalorder %s26, 3
      %p43 = por %p41, %p42
      %p44 = scmp.ne.s32.totalorder %s36, %s39
      %p45 = scmp.eq.s32.totalorder %s26, 0
      %p46 = por %p44, %p45
      %p47 = scmp.ne.s32.totalorder %s36, %s39
      %p48 = scmp.eq.s32.totalorder %s31, 3
      %p49 = por %p47, %p48
      %p50 = scmp.ne.s32.totalorder %s39, %s40
      %p51 = scmp.eq.s32.totalorder %s31, 0
      %p52 = por %p50, %p51
      %p53 = scmp.ne.s32.totalorder %s39, %s40
      %p54 = scmp.eq.s32.totalorder %s32, 3
      %p55 = por %p53, %p54
      %p57 = scmp.ne.s32.totalorder %s40, %s56
      %p58 = scmp.eq.s32.totalorder %s32, 0
      %p59 = por %p57, %p58
      %s61 = sadd.s32 %s60, 1
      %p64 = scmp.eq.s32.totalorder %s26, 3
      %p65 = scmp.ne.s32.totalorder %s60, %s62
      %p66 = scmp.eq.s32.totalorder %s26, 0
      %p67 = por %p65, %p66
      %p68 = scmp.ne.s32.totalorder %s60, %s62
      %p69 = scmp.eq.s32.totalorder %s31, 3
      %p70 = por %p68, %p69
      %p71 = scmp.ne.s32.totalorder %s62, %s63
      %p72 = scmp.eq.s32.totalorder %s31, 0
      %p73 = por %p71, %p72
      %p74 = scmp.ne.s32.totalorder %s62, %s63
      %p75 = scmp.eq.s32.totalorder %s32, 3
      %p76 = por %p74, %p75
      %p78 = scmp.ne.s32.totalorder %s63, %s77
      %p79 = scmp.eq.s32.totalorder %s32, 0
      %p80 = por %p78, %p79
      %s82 = sadd.s32 %s81, 1
      %p85 = scmp.eq.s32.totalorder %s26, 3
      %p86 = scmp.ne.s32.totalorder %s81, %s83
      %p87 = scmp.eq.s32.totalorder %s26, 0
      %p88 = por %p86, %p87
      %p89 = scmp.ne.s32.totalorder %s81, %s83
      %p90 = scmp.eq.s32.totalorder %s31, 3
      %p91 = por %p89, %p90
      %p92 = scmp.ne.s32.totalorder %s83, %s84
      %p93 = scmp.eq.s32.totalorder %s31, 0
      %p94 = por %p92, %p93
      %p95 = scmp.ne.s32.totalorder %s83, %s84
      %p96 = scmp.eq.s32.totalorder %s32, 3
      %p97 = por %p95, %p96
      %p99 = scmp.ne.s32.totalorder %s84, %s98
      %p100 = scmp.eq.s32.totalorder %s32, 0
      %p101 = por %p99, %p100
      %s103 = sadd.s32 %s102, 1
      %p106 = scmp.eq.s32.totalorder %s26, 3
      %p107 = scmp.ne.s32.totalorder %s102, %s104
      %p108 = scmp.eq.s32.totalorder %s26, 0
      %p109 = por %p107, %p108
      %p110 = scmp.ne.s32.totalorder %s102, %s104
      %p111 = scmp.eq.s32.totalorder %s31, 3
      %p112 = por %p110, %p111
      %p113 = scmp.ne.s32.totalorder %s104, %s105
      %p114 = scmp.eq.s32.totalorder %s31, 0
      %p115 = por %p113, %p114
      %p116 = scmp.ne.s32.totalorder %s104, %s105
      %p117 = scmp.eq.s32.totalorder %s32, 3
      %p118 = por %p116, %p117
      %p120 = scmp.ne.s32.totalorder %s105, %s119
      %p121 = scmp.eq.s32.totalorder %s32, 0
      %p122 = por %p120, %p121
      %s124 = sadd.s32 %s123, 1
      %p127 = scmp.eq.s32.totalorder %s26, 3
      %p128 = scmp.ne.s32.totalorder %s123, %s125
      %p129 = scmp.eq.s32.totalorder %s26, 0
      %p130 = por %p128, %p129
      %p131 = scmp.ne.s32.totalorder %s123, %s125
      %p132 = scmp.eq.s32.totalorder %s31, 3
      %p133 = por %p131, %p132
      %p134 = scmp.ne.s32.totalorder %s125, %s126
      %p135 = scmp.eq.s32.totalorder %s31, 0
      %p136 = por %p134, %p135
      %p137 = scmp.ne.s32.totalorder %s125, %s126
      %p138 = scmp.eq.s32.totalorder %s32, 3
      %p139 = por %p137, %p138
      %p141 = scmp.ne.s32.totalorder %s126, %s140
      %p142 = scmp.eq.s32.totalorder %s32, 0
      %p143 = por %p141, %p142
      %s145 = sadd.s32 %s144, 1
      %p148 = scmp.eq.s32.totalorder %s26, 3
      %p149 = scmp.ne.s32.totalorder %s144, %s146
      %p150 = scmp.eq.s32.totalorder %s26, 0
      %p151 = por %p149, %p150
      %p152 = scmp.ne.s32.totalorder %s144, %s146
      %p153 = scmp.eq.s32.totalorder %s31, 3
      %p154 = por %p152, %p153
      %p155 = scmp.ne.s32.totalorder %s146, %s147
      %p156 = scmp.eq.s32.totalorder %s31, 0
      %p157 = por %p155, %p156
      %p158 = scmp.ne.s32.totalorder %s146, %s147
      %p159 = scmp.eq.s32.totalorder %s32, 3
      %p160 = por %p158, %p159
      %p162 = scmp.ne.s32.totalorder %s147, %s161
      %p163 = scmp.eq.s32.totalorder %s32, 0
      %p164 = por %p162, %p163
      %s165 = ssub.s32 %s26, %s33
      %p166 = scmp.eq.s32.totalorder %s165, 0
      %s168 = sadd.s32 %s167, 1
      %s169 = scalar_select %p166, %s167, %s168
      %p172 = pneg %p166
      %p173 = scmp.eq.s32.totalorder %s26, 3
      %p174 = por %p172, %p173
      %p175 = scmp.ne.s32.totalorder %s167, %s170
      %p176 = scmp.eq.s32.totalorder %s26, 0
      %p177 = por %p175, %p176
      %p178 = scmp.ne.s32.totalorder %s167, %s170
      %p179 = scmp.eq.s32.totalorder %s31, 3
      %p180 = por %p178, %p179
      %p181 = scmp.ne.s32.totalorder %s170, %s171
      %p182 = scmp.eq.s32.totalorder %s31, 0
      %p183 = por %p181, %p182
      %p184 = scmp.ne.s32.totalorder %s170, %s171
      %p185 = scmp.eq.s32.totalorder %s32, 3
      %p186 = por %p184, %p185
      %p188 = scmp.ne.s32.totalorder %s171, %s187
      %p189 = scmp.eq.s32.totalorder %s32, 0
      %p190 = por %p188, %p189
      %s191 = ssub.s32 %s26, %s33
      %p192 = scmp.eq.s32.totalorder %s191, 0
      %s194 = sadd.s32 %s193, 1
      %s195 = scalar_select %p192, %s193, %s194
      %p198 = pneg %p192
      %p199 = scmp.eq.s32.totalorder %s26, 3
      %p200 = por %p198, %p199
      %p201 = scmp.ne.s32.totalorder %s193, %s196
      %p202 = scmp.eq.s32.totalorder %s26, 0
      %p203 = por %p201, %p202
      %p204 = scmp.ne.s32.totalorder %s193, %s196
      %p205 = scmp.eq.s32.totalorder %s31, 3
      %p206 = por %p204, %p205
      %p207 = scmp.ne.s32.totalorder %s196, %s197
      %p208 = scmp.eq.s32.totalorder %s31, 0
      %p209 = por %p207, %p208
      %p210 = scmp.ne.s32.totalorder %s196, %s197
      %p211 = scmp.eq.s32.totalorder %s32, 3
      %p212 = por %p210, %p211
      %p214 = scmp.ne.s32.totalorder %s197, %s213
      %p215 = scmp.eq.s32.totalorder %s32, 0
      %p216 = por %p214, %p215
      %s217 = ssub.s32 %s26, %s33
      %p218 = scmp.eq.s32.totalorder %s217, 0
      %s220 = sadd.s32 %s219, 1
      %s221 = scalar_select %p218, %s219, %s220
      %p224 = pneg %p218
      %p225 = scmp.eq.s32.totalorder %s26, 3
      %p226 = por %p224, %p225
      %p227 = scmp.ne.s32.totalorder %s219, %s222
      %p228 = scmp.eq.s32.totalorder %s26, 0
      %p229 = por %p227, %p228
      %p230 = scmp.ne.s32.totalorder %s219, %s222
      %p231 = scmp.eq.s32.totalorder %s31, 3
      %p232 = por %p230, %p231
      %p233 = scmp.ne.s32.totalorder %s222, %s223
      %p234 = scmp.eq.s32.totalorder %s31, 0
      %p235 = por %p233, %p234
      %p236 = scmp.ne.s32.totalorder %s222, %s223
      %p237 = scmp.eq.s32.totalorder %s32, 3
      %p238 = por %p236, %p237
      %p240 = scmp.ne.s32.totalorder %s223, %s239
      %p241 = scmp.eq.s32.totalorder %s32, 0
      %p242 = por %p240, %p241
      %p243 = scmp.le.s32.totalorder 1, %s26
      %p244 = scmp.lt.s32.totalorder %s26, 5
      %p245 = pnand %p243, %p244
      %p246 = pneg %p245
      // Predicated region
      $region9: #{tpu_custom_call.1} parent=5 // pred_check
        _
      $region10: #{tpu_custom_call.1} parent=5 // pred_check_branch
        %248 = sbr.rel (%p245) target = $region12
      $region11: #{tpu_custom_call.1} parent=5 // pred_region
        %s249 = ssub.s32 %s26, 1
        // Predicated region
        $region13: #{tpu_custom_call.1} parent=11 // pred_check
          %p250 = pneg %p73
        $region14: #{tpu_custom_call.1} parent=11 // pred_check_branch
          %252 = sbr.rel (%p250) target = $region16
        $region15: #{tpu_custom_call.1} parent=11 // pred_region
          _
        $region16: #{tpu_custom_call.1} parent=11 // pred_fallthru
          _
        // Predicated region
        $region17: #{tpu_custom_call.1} parent=11 // pred_check
          %p253 = pneg %p94
        $region18: #{tpu_custom_call.1} parent=11 // pred_check_branch
          %255 = sbr.rel (%p253) target = $region20
        $region19: #{tpu_custom_call.1} parent=11 // pred_region
          _
        $region20: #{tpu_custom_call.1} parent=11 // pred_fallthru
          _
        // Predicated region
        $region21: #{tpu_custom_call.1} parent=11 // pred_check
          %p256 = pneg %p115
        $region22: #{tpu_custom_call.1} parent=11 // pred_check_branch
          %258 = sbr.rel (%p256) target = $region24
        $region23: #{tpu_custom_call.1} parent=11 // pred_region
          %s260 = ssub.s32 512, 512
          %261 = vsyncadd [#allocation6], %s260
          %s262 = sshll.u32 [#allocation5], 4
          %s263 = int_to_ptr.vmem [resolvable:$true] %s262
          %268 = dma.hbm_to_vmem [thread:$0]  %s3, 512, %s263, [#allocation6], 128, 128, 8
        $region24: #{tpu_custom_call.1} parent=11 // pred_fallthru
          _
        // Predicated region
        $region25: #{tpu_custom_call.1} parent=11 // pred_check
          %p269 = pneg %p136
        $region26: #{tpu_custom_call.1} parent=11 // pred_check_branch
          %271 = sbr.rel (%p269) target = $region28
        $region27: #{tpu_custom_call.1} parent=11 // pred_region
          %s273 = ssub.s32 512, 512
          %274 = vsyncadd [#allocation6], %s273
          %s275 = sshll.u32 [#allocation7], 4
          %s276 = int_to_ptr.vmem [resolvable:$true] %s275
          %281 = dma.hbm_to_vmem [thread:$0]  %s4, 512, %s276, [#allocation6], 128, 128, 8
        $region28: #{tpu_custom_call.1} parent=11 // pred_fallthru
          _
        // Predicated region
        $region29: #{tpu_custom_call.1} parent=11 // pred_check
          %p282 = pneg %p157
        $region30: #{tpu_custom_call.1} parent=11 // pred_check_branch
          %284 = sbr.rel (%p282) target = $region32
        $region31: #{tpu_custom_call.1} parent=11 // pred_region
          %s286 = ssub.s32 512, 512
          %287 = vsyncadd [#allocation9], %s286
          %s288 = sshll.u32 [#allocation8], 4
          %s289 = int_to_ptr.vmem [resolvable:$true] %s288
          %294 = dma.hbm_to_vmem [thread:$0]  %s5, 512, %s289, [#allocation9], 128, 128, 8
        $region32: #{tpu_custom_call.1} parent=11 // pred_fallthru
          _
      $region12: #{tpu_custom_call.1} parent=5 // pred_fallthru
        _
      %p295 = scmp.lt.s32.totalorder %s26, 4
      // Predicated region
      $region33: #{tpu_custom_call.1} parent=5 // pred_check
        %p296 = pneg %p295
      $region34: #{tpu_custom_call.1} parent=5 // pred_check_branch
        %298 = sbr.rel (%p296) target = $region36
      $region35: #{tpu_custom_call.1} parent=5 // pred_region
        // Predicated region
        $region37: #{tpu_custom_call.1} parent=35 // pred_check
          %p299 = pneg %p46
        $region38: #{tpu_custom_call.1} parent=35 // pred_check_branch
          %301 = sbr.rel (%p299) target = $region40
        $region39: #{tpu_custom_call.1} parent=35 // pred_region
          %s302 = sand.u32 %s36, 1
          %s303 = scalar_lea.sflag [#allocation3], %s302
          %s304 = sand.u32 %s36, 1
          %s305 = smul.addr %s304, 8
          %s306 = scalar_lea.vmem [#allocation2], %s305
          %s308 = ssub.s32 128, 128
          %309 = vsyncadd %s303, %s308
          %s310 = smul.addr %s26, 128
          %s311 = scalar_lea.hbm %s0, %s310
          %s313 = sshll.u32 %s306, 4
          %s314 = int_to_ptr.vmem [resolvable:$true] %s313
          %316 = dma.hbm_to_vmem [thread:$0]  %s311, 128, %s314, %s303
        $region40: #{tpu_custom_call.1} parent=35 // pred_fallthru
          _
      $region36: #{tpu_custom_call.1} parent=5 // pred_fallthru
        _
      %p317 = scmp.le.s32.totalorder 1, %s26
      %p318 = scmp.lt.s32.totalorder %s26, 5
      %p319 = pnand %p317, %p318
      %p320 = pneg %p319
      // Predicated region
      $region41: #{tpu_custom_call.1} parent=5 // pred_check
        _
      $region42: #{tpu_custom_call.1} parent=5 // pred_check_branch
        %322 = sbr.rel (%p319) target = $region44
      $region43: #{tpu_custom_call.1} parent=5 // pred_region
        %s323 = ssub.s32 %s26, 1
        %s324 = sand.u32 %s39, 1
        %s325 = scalar_lea.sflag [#allocation3], %s324
        %s326 = sand.u32 %s39, 1
        %s327 = smul.addr %s326, 8
        %s328 = scalar_lea.vmem [#allocation2], %s327
        // Predicated region
        $region45: #{tpu_custom_call.1} parent=43 // pred_check
          %p329 = pneg %p52
        $region46: #{tpu_custom_call.1} parent=43 // pred_check_branch
          %331 = sbr.rel (%p329) target = $region48
        $region47: #{tpu_custom_call.1} parent=43 // pred_region
          %332 = dma.done %s325, 128
        $region48: #{tpu_custom_call.1} parent=43 // pred_fallthru
          _
        // Predicated region
        $region49: #{tpu_custom_call.1} parent=43 // pred_check
          %p333 = pneg %p115
        $region50: #{tpu_custom_call.1} parent=43 // pred_check_branch
          %335 = sbr.rel (%p333) target = $region52
        $region51: #{tpu_custom_call.1} parent=43 // pred_region
          %336 = dma.done [#allocation6], 512
        $region52: #{tpu_custom_call.1} parent=43 // pred_fallthru
          _
        // Predicated region
        $region53: #{tpu_custom_call.1} parent=43 // pred_check
          %p337 = pneg %p136
        $region54: #{tpu_custom_call.1} parent=43 // pred_check_branch
          %339 = sbr.rel (%p337) target = $region56
        $region55: #{tpu_custom_call.1} parent=43 // pred_region
          %340 = dma.done [#allocation6], 512
        $region56: #{tpu_custom_call.1} parent=43 // pred_fallthru
          _
        // Predicated region
        $region57: #{tpu_custom_call.1} parent=43 // pred_check
          %p341 = pneg %p157
        $region58: #{tpu_custom_call.1} parent=43 // pred_check_branch
          %343 = sbr.rel (%p341) target = $region60
        $region59: #{tpu_custom_call.1} parent=43 // pred_region
          %344 = dma.done [#allocation9], 512
        $region60: #{tpu_custom_call.1} parent=43 // pred_fallthru
          _
        %s345 = sand.u32 %s39, 1
        %s346 = scalar_lea.sflag [#allocation3], %s345
        %s347 = sand.u32 %s39, 1
        %s348 = smul.addr %s347, 8
        %s349 = scalar_lea.vmem [#allocation2], %s348
        %p350 = pneg %p52
        %p351 = pneg %p49
        %p352 = pneg %p73
        %p353 = pneg %p70
        %p354 = pneg %p94
        %p355 = pneg %p91
        %p356 = pneg %p115
        %p357 = pneg %p112
        %p358 = pneg %p136
        %p359 = pneg %p133
        %p360 = pneg %p157
        %p361 = pneg %p154
        %p362 = pneg %p183
        %p363 = pneg %p180
        %s364 = sand.u32 %s170, 1
        %s365 = scalar_lea.sflag [#allocation4], %s364
        %s366 = sand.u32 %s170, 1
        %s367 = smul.addr %s366, 8
        %s368 = scalar_lea.vmem [#allocation10], %s367
        %p369 = pneg %p209
        %p370 = pneg %p206
        %s371 = sand.u32 %s31, 1
        %s372 = scalar_lea.sflag [#allocation12], %s371
        %s373 = sand.u32 %s196, 1
        %s374 = smul.addr %s373, 8
        %s375 = scalar_lea.vmem [#allocation11], %s374
        %p376 = pneg %p235
        %p377 = pneg %p232
        %s378 = sand.u32 %s31, 1
        %s379 = scalar_lea.sflag [#allocation12], %s378
        %s380 = sand.u32 %s222, 1
        %s381 = smul.addr %s380, 8
        %s382 = scalar_lea.vmem [#allocation13], %s381
        %v383 = vld [vmem:[%s328] sm:$0xff]
        %v384 = vld [vmem:[%s1] sm:$0x1]
        %v385 = vld [vmem:[%s2] sm:$0x1]
        %vm386 = vcmask 261120
        %v387 = vsel %vm386, %v383, 0.0
        %388 = vadd.xlane.f32.xlu0 %v387
        %v389 = vpop.xlane.xlu0 %388
        %v390 = vrcp.pop 32.0
        %v391 = vmul.f32 %v389, %v390
        %v392 = vsub.f32 %v383, %v391
        %v393 = vmul.f32 %v392, %v392
        %v394 = vsel %vm386, %v393, 0.0
        %395 = vadd.xlane.f32.xlu0 %v394
        %v396 = vpop.xlane.xlu0 %395
        %v397 = vmul.f32 %v396, %v390
        %v398 = vadd.f32 %v397, 1e-05
        %v399 = vrsqrt.pop %v398
        %v400 = vmul.f32 %v392, %v399
        %v402 = vlaneseq
        %v403 = vshrl.u32 %v402, 7
        %v404 = vsub.s32 0, %v403
        %v405 = vrot.slane %v384, %v404
        %v407 = vmul.f32 %v400, %v405
        %v409 = vlaneseq
        %v410 = vshrl.u32 %v409, 7
        %v411 = vsub.s32 0, %v410
        %v412 = vrot.slane %v385, %v411
        %v414 = vadd.f32 %v407, %v412
        %v415 = vld [vmem:[#allocation5] sm:$0xff]
        %v416 = vld [vmem:[#allocation5 + $0x8] sm:$0xff]
        %v417 = vld [vmem:[#allocation5 + $0x10] sm:$0xff]
        %v418 = vld [vmem:[#allocation5 + $0x18] sm:$0xff]
        %v420 = vsel %vm386, %v414, 0
        %422 = vmatprep.subr.mxu0 0.0
        %423 = vmatpush1.msra.mxu0 0.0
        %424 = vmatprep.subr.mxu0 0.0
        %425 = vmatpush1.msra.mxu0 0.0
        %426 = vmatprep.subr.mxu0 0.0
        %427 = vmatpush1.msra.mxu0 0.0
        %428 = vmatprep.subr.mxu0 0.0
        %429 = vmatpush1.msra.mxu0 0.0
        %430 = vmatprep.subr.mxu0 0.0
        %431 = vmatpush1.msra.mxu0 0.0
        %432 = vmatprep.subr.mxu0 0.0
        %433 = vmatpush1.msra.mxu0 0.0
        %434 = vmatprep.subr.mxu0 0.0
        %435 = vmatpush1.msra.mxu0 0.0
        %436 = vmatprep.subr.mxu0 0.0
        %437 = vmatpush1.msra.mxu0 0.0
        %438 = vmatprep.subr.mxu0 0.0
        %439 = vmatpush1.msra.mxu0 0.0
        %440 = vmatprep.subr.mxu0 0.0
        %441 = vmatpush1.msra.mxu0 0.0
        %442 = vmatprep.subr.mxu0 0.0
        %443 = vmatpush1.msra.mxu0 0.0
        %444 = vmatprep.subr.mxu0 0.0
        %445 = vmatpush1.msra.mxu0 0.0
        %446 = vmatprep.subr.mxu0 0.0
        %447 = vmatpush1.msra.mxu0 %v418
        %448 = vmatprep.subr.mxu0 0.0
        %449 = vmatpush1.msra.mxu0 %v417
        %450 = vmatprep.subr.mxu0 0.0
        %451 = vmatpush1.msra.mxu0 %v416
        %452 = vmatprep.subr.mxu0 0.0
        %453 = vmatpush1.msra.mxu0 %v415
        %454 = vmatprep.subr.mxu0 0.0
        %455 = vmatpush2.msra.mxu0 0.0
        %456 = vmatprep.subr.mxu0 0.0
        %457 = vmatpush2.msra.mxu0 0.0
        %458 = vmatprep.subr.mxu0 0.0
        %459 = vmatpush2.msra.mxu0 0.0
        %460 = vmatprep.subr.mxu0 0.0
        %461 = vmatpush2.msra.mxu0 0.0
        %462 = vmatprep.subr.mxu0 0.0
        %463 = vmatpush2.msra.mxu0 0.0
        %464 = vmatprep.subr.mxu0 0.0
        %465 = vmatpush2.msra.mxu0 0.0
        %466 = vmatprep.subr.mxu0 0.0
        %467 = vmatpush2.msra.mxu0 0.0
        %468 = vmatprep.subr.mxu0 0.0
        %469 = vmatpush2.msra.mxu0 0.0
        %470 = vmatprep.subr.mxu0 0.0
        %471 = vmatpush2.msra.mxu0 0.0
        %472 = vmatprep.subr.mxu0 0.0
        %473 = vmatpush2.msra.mxu0 0.0
        %474 = vmatprep.subr.mxu0 0.0
        %475 = vmatpush2.msra.mxu0 0.0
        %476 = vmatprep.subr.mxu0 0.0
        %477 = vmatpush2.msra.mxu0 0.0
        %478 = vmatprep.subr.mxu0 0.0
        %479 = vmatpush2.msra.mxu0 0.0
        %480 = vmatprep.subr.mxu0 0.0
        %481 = vmatpush2.msra.mxu0 0.0
        %482 = vmatprep.subr.mxu0 0.0
        %483 = vmatpush2.msra.mxu0 0.0
        %484 = vmatprep.subr.mxu0 0.0
        %485 = vmatpush2.msra.mxu0 0.0
        %486 = vmatprep.mubr.f32.mxu0 0.0
        %487 = vmatmul.mubr.f32.gmra.mxu0 %v420
        %v488 = vpop.f32.mrf.mxu0
        %v489 = vadd.f32 0.0, %v488
        %v490 = vpop.f32.mrf.mxu0
        %491 = vdwg.mxu0
        %492 = vst.msk [vmem:[%s368] sm:$0xff] %vm386, %v489
        %v493 = vld [vmem:[#allocation7] sm:$0xff]
        %v494 = vld [vmem:[#allocation7 + $0x8] sm:$0xff]
        %v495 = vld [vmem:[#allocation7 + $0x10] sm:$0xff]
        %v496 = vld [vmem:[#allocation7 + $0x18] sm:$0xff]
        %497 = vmatprep.subr.mxu0 0.0
        %498 = vmatpush1.msra.mxu0 0.0
        %499 = vmatprep.subr.mxu0 0.0
        %500 = vmatpush1.msra.mxu0 0.0
        %501 = vmatprep.subr.mxu0 0.0
        %502 = vmatpush1.msra.mxu0 0.0
        %503 = vmatprep.subr.mxu0 0.0
        %504 = vmatpush1.msra.mxu0 0.0
        %505 = vmatprep.subr.mxu0 0.0
        %506 = vmatpush1.msra.mxu0 0.0
        %507 = vmatprep.subr.mxu0 0.0
        %508 = vmatpush1.msra.mxu0 0.0
        %509 = vmatprep.subr.mxu0 0.0
        %510 = vmatpush1.msra.mxu0 0.0
        %511 = vmatprep.subr.mxu0 0.0
        %512 = vmatpush1.msra.mxu0 0.0
        %513 = vmatprep.subr.mxu0 0.0
        %514 = vmatpush1.msra.mxu0 0.0
        %515 = vmatprep.subr.mxu0 0.0
        %516 = vmatpush1.msra.mxu0 0.0
        %517 = vmatprep.subr.mxu0 0.0
        %518 = vmatpush1.msra.mxu0 0.0
        %519 = vmatprep.subr.mxu0 0.0
        %520 = vmatpush1.msra.mxu0 0.0
        %521 = vmatprep.subr.mxu0 0.0
        %522 = vmatpush1.msra.mxu0 %v496
        %523 = vmatprep.subr.mxu0 0.0
        %524 = vmatpush1.msra.mxu0 %v495
        %525 = vmatprep.subr.mxu0 0.0
        %526 = vmatpush1.msra.mxu0 %v494
        %527 = vmatprep.subr.mxu0 0.0
        %528 = vmatpush1.msra.mxu0 %v493
        %529 = vmatprep.subr.mxu0 0.0
        %530 = vmatpush2.msra.mxu0 0.0
        %531 = vmatprep.subr.mxu0 0.0
        %532 = vmatpush2.msra.mxu0 0.0
        %533 = vmatprep.subr.mxu0 0.0
        %534 = vmatpush2.msra.mxu0 0.0
        %535 = vmatprep.subr.mxu0 0.0
        %536 = vmatpush2.msra.mxu0 0.0
        %537 = vmatprep.subr.mxu0 0.0
        %538 = vmatpush2.msra.mxu0 0.0
        %539 = vmatprep.subr.mxu0 0.0
        %540 = vmatpush2.msra.mxu0 0.0
        %541 = vmatprep.subr.mxu0 0.0
        %542 = vmatpush2.msra.mxu0 0.0
        %543 = vmatprep.subr.mxu0 0.0
        %544 = vmatpush2.msra.mxu0 0.0
        %545 = vmatprep.subr.mxu0 0.0
        %546 = vmatpush2.msra.mxu0 0.0
        %547 = vmatprep.subr.mxu0 0.0
        %548 = vmatpush2.msra.mxu0 0.0
        %549 = vmatprep.subr.mxu0 0.0
        %550 = vmatpush2.msra.mxu0 0.0
        %551 = vmatprep.subr.mxu0 0.0
        %552 = vmatpush2.msra.mxu0 0.0
        %553 = vmatprep.subr.mxu0 0.0
        %554 = vmatpush2.msra.mxu0 0.0
        %555 = vmatprep.subr.mxu0 0.0
        %556 = vmatpush2.msra.mxu0 0.0
        %557 = vmatprep.subr.mxu0 0.0
        %558 = vmatpush2.msra.mxu0 0.0
        %559 = vmatprep.subr.mxu0 0.0
        %560 = vmatpush2.msra.mxu0 0.0
        %561 = vmatprep.mubr.f32.mxu0 0.0
        %562 = vmatmul.mubr.f32.gmra.mxu0 %v420
        %v563 = vpop.f32.mrf.mxu0
        %v564 = vadd.f32 0.0, %v563
        %v565 = vpop.f32.mrf.mxu0
        %566 = vdwg.mxu0
        %567 = vst.msk [vmem:[%s375] sm:$0xff] %vm386, %v564
        %v568 = vld [vmem:[#allocation8] sm:$0xff]
        %v569 = vld [vmem:[#allocation8 + $0x8] sm:$0xff]
        %v570 = vld [vmem:[#allocation8 + $0x10] sm:$0xff]
        %v571 = vld [vmem:[#allocation8 + $0x18] sm:$0xff]
        %572 = vmatprep.subr.mxu0 0.0
        %573 = vmatpush1.msra.mxu0 0.0
        %574 = vmatprep.subr.mxu0 0.0
        %575 = vmatpush1.msra.mxu0 0.0
        %576 = vmatprep.subr.mxu0 0.0
        %577 = vmatpush1.msra.mxu0 0.0
        %578 = vmatprep.subr.mxu0 0.0
        %579 = vmatpush1.msra.mxu0 0.0
        %580 = vmatprep.subr.mxu0 0.0
        %581 = vmatpush1.msra.mxu0 0.0
        %582 = vmatprep.subr.mxu0 0.0
        %583 = vmatpush1.msra.mxu0 0.0
        %584 = vmatprep.subr.mxu0 0.0
        %585 = vmatpush1.msra.mxu0 0.0
        %586 = vmatprep.subr.mxu0 0.0
        %587 = vmatpush1.msra.mxu0 0.0
        %588 = vmatprep.subr.mxu0 0.0
        %589 = vmatpush1.msra.mxu0 0.0
        %590 = vmatprep.subr.mxu0 0.0
        %591 = vmatpush1.msra.mxu0 0.0
        %592 = vmatprep.subr.mxu0 0.0
        %593 = vmatpush1.msra.mxu0 0.0
        %594 = vmatprep.subr.mxu0 0.0
        %595 = vmatpush1.msra.mxu0 0.0
        %596 = vmatprep.subr.mxu0 0.0
        %597 = vmatpush1.msra.mxu0 %v571
        %598 = vmatprep.subr.mxu0 0.0
        %599 = vmatpush1.msra.mxu0 %v570
        %600 = vmatprep.subr.mxu0 0.0
        %601 = vmatpush1.msra.mxu0 %v569
        %602 = vmatprep.subr.mxu0 0.0
        %603 = vmatpush1.msra.mxu0 %v568
        %604 = vmatprep.subr.mxu0 0.0
        %605 = vmatpush2.msra.mxu0 0.0
        %606 = vmatprep.subr.mxu0 0.0
        %607 = vmatpush2.msra.mxu0 0.0
        %608 = vmatprep.subr.mxu0 0.0
        %609 = vmatpush2.msra.mxu0 0.0
        %610 = vmatprep.subr.mxu0 0.0
        %611 = vmatpush2.msra.mxu0 0.0
        %612 = vmatprep.subr.mxu0 0.0
        %613 = vmatpush2.msra.mxu0 0.0
        %614 = vmatprep.subr.mxu0 0.0
        %615 = vmatpush2.msra.mxu0 0.0
        %616 = vmatprep.subr.mxu0 0.0
        %617 = vmatpush2.msra.mxu0 0.0
        %618 = vmatprep.subr.mxu0 0.0
        %619 = vmatpush2.msra.mxu0 0.0
        %620 = vmatprep.subr.mxu0 0.0
        %621 = vmatpush2.msra.mxu0 0.0
        %622 = vmatprep.subr.mxu0 0.0
        %623 = vmatpush2.msra.mxu0 0.0
        %624 = vmatprep.subr.mxu0 0.0
        %625 = vmatpush2.msra.mxu0 0.0
        %626 = vmatprep.subr.mxu0 0.0
        %627 = vmatpush2.msra.mxu0 0.0
        %628 = vmatprep.subr.mxu0 0.0
        %629 = vmatpush2.msra.mxu0 0.0
        %630 = vmatprep.subr.mxu0 0.0
        %631 = vmatpush2.msra.mxu0 0.0
        %632 = vmatprep.subr.mxu0 0.0
        %633 = vmatpush2.msra.mxu0 0.0
        %634 = vmatprep.subr.mxu0 0.0
        %635 = vmatpush2.msra.mxu0 0.0
        %636 = vmatprep.mubr.f32.mxu0 0.0
        %637 = vmatmul.mubr.f32.gmra.mxu0 %v420
        %v638 = vpop.f32.mrf.mxu0
        %v639 = vadd.f32 0.0, %v638
        %v640 = vpop.f32.mrf.mxu0
        %641 = vdwg.mxu0
        %642 = vst.msk [vmem:[%s382] sm:$0xff] %vm386, %v639
        %s643 = sand.u32 %s170, 1
        %s644 = scalar_lea.sflag [#allocation4], %s643
        %s645 = sand.u32 %s170, 1
        %s646 = smul.addr %s645, 8
        %s647 = scalar_lea.vmem [#allocation10], %s646
        %s648 = sand.u32 %s31, 1
        %s649 = scalar_lea.sflag [#allocation12], %s648
        %s650 = sand.u32 %s196, 1
        %s651 = smul.addr %s650, 8
        %s652 = scalar_lea.vmem [#allocation11], %s651
        %s653 = sand.u32 %s31, 1
        %s654 = scalar_lea.sflag [#allocation12], %s653
        %s655 = sand.u32 %s222, 1
        %s656 = smul.addr %s655, 8
        %s657 = scalar_lea.vmem [#allocation13], %s656
        // Predicated region
        $region61: #{tpu_custom_call.1} parent=43 // pred_check
          %p658 = pneg %p180
        $region62: #{tpu_custom_call.1} parent=43 // pred_check_branch
          %660 = sbr.rel (%p658) target = $region64
        $region63: #{tpu_custom_call.1} parent=43 // pred_region
          %s662 = ssub.s32 128, 128
          %663 = vsyncadd %s644, %s662
          %s664 = smul.addr %s31, 128
          %s665 = scalar_lea.hbm %s6, %s664
          %s667 = sshll.u32 %s647, 4
          %s668 = int_to_ptr.vmem [resolvable:$true] %s667
          %670 = dma.vmem_to_hbm [thread:$0]  %s668, 128, %s665, %s644
        $region64: #{tpu_custom_call.1} parent=43 // pred_fallthru
          _
        // Predicated region
        $region65: #{tpu_custom_call.1} parent=43 // pred_check
          %p671 = pneg %p206
        $region66: #{tpu_custom_call.1} parent=43 // pred_check_branch
          %673 = sbr.rel (%p671) target = $region68
        $region67: #{tpu_custom_call.1} parent=43 // pred_region
          %s675 = ssub.s32 128, 128
          %676 = vsyncadd %s649, %s675
          %s677 = smul.addr %s31, 128
          %s678 = scalar_lea.hbm %s7, %s677
          %s680 = sshll.u32 %s652, 4
          %s681 = int_to_ptr.vmem [resolvable:$true] %s680
          %683 = dma.vmem_to_hbm [thread:$0]  %s681, 128, %s678, %s649
        $region68: #{tpu_custom_call.1} parent=43 // pred_fallthru
          _
        // Predicated region
        $region69: #{tpu_custom_call.1} parent=43 // pred_check
          %p684 = pneg %p232
        $region70: #{tpu_custom_call.1} parent=43 // pred_check_branch
          %686 = sbr.rel (%p684) target = $region72
        $region71: #{tpu_custom_call.1} parent=43 // pred_region
          %s688 = ssub.s32 128, 128
          %689 = vsyncadd %s654, %s688
          %s690 = smul.addr %s31, 128
          %s691 = scalar_lea.hbm %s8, %s690
          %s693 = sshll.u32 %s657, 4
          %s694 = int_to_ptr.vmem [resolvable:$true] %s693
          %696 = dma.vmem_to_hbm [thread:$0]  %s694, 128, %s691, %s654
        $region72: #{tpu_custom_call.1} parent=43 // pred_fallthru
          _
      $region44: #{tpu_custom_call.1} parent=5 // pred_fallthru
        _
      %p697 = scmp.le.s32.totalorder 2, %s26
      // Predicated region
      $region73: #{tpu_custom_call.1} parent=5 // pred_check
        %p698 = pneg %p697
      $region74: #{tpu_custom_call.1} parent=5 // pred_check_branch
        %700 = sbr.rel (%p698) target = $region76
      $region75: #{tpu_custom_call.1} parent=5 // pred_region
        %s701 = ssub.s32 %s26, 2
        // Predicated region
        $region77: #{tpu_custom_call.1} parent=75 // pred_check
          %p702 = pneg %p186
        $region78: #{tpu_custom_call.1} parent=75 // pred_check_branch
          %704 = sbr.rel (%p702) target = $region80
        $region79: #{tpu_custom_call.1} parent=75 // pred_region
          %s705 = sand.u32 %s171, 1
          %s706 = scalar_lea.sflag [#allocation4], %s705
          %s707 = sand.u32 %s171, 1
          %s708 = smul.addr %s707, 8
          %s709 = scalar_lea.vmem [#allocation10], %s708
          %710 = dma.done %s706, 128
        $region80: #{tpu_custom_call.1} parent=75 // pred_fallthru
          _
        // Predicated region
        $region81: #{tpu_custom_call.1} parent=75 // pred_check
          %p711 = pneg %p212
        $region82: #{tpu_custom_call.1} parent=75 // pred_check_branch
          %713 = sbr.rel (%p711) target = $region84
        $region83: #{tpu_custom_call.1} parent=75 // pred_region
          %s714 = sand.u32 %s32, 1
          %s715 = scalar_lea.sflag [#allocation12], %s714
          %s716 = sand.u32 %s197, 1
          %s717 = smul.addr %s716, 8
          %s718 = scalar_lea.vmem [#allocation11], %s717
          %719 = dma.done %s715, 128
        $region84: #{tpu_custom_call.1} parent=75 // pred_fallthru
          _
        // Predicated region
        $region85: #{tpu_custom_call.1} parent=75 // pred_check
          %p720 = pneg %p238
        $region86: #{tpu_custom_call.1} parent=75 // pred_check_branch
          %722 = sbr.rel (%p720) target = $region88
        $region87: #{tpu_custom_call.1} parent=75 // pred_region
          %s723 = sand.u32 %s32, 1
          %s724 = scalar_lea.sflag [#allocation12], %s723
          %s725 = sand.u32 %s223, 1
          %s726 = smul.addr %s725, 8
          %s727 = scalar_lea.vmem [#allocation13], %s726
          %728 = dma.done %s724, 128
        $region88: #{tpu_custom_call.1} parent=75 // pred_fallthru
          _
      $region76: #{tpu_custom_call.1} parent=5 // pred_fallthru
        _
    $region6: #{tpu_custom_call.1} parent=1 // loop_footer
      %s30 = sadd.s32 1, %s26
    $region7: #{tpu_custom_call.1} parent=1 // loop_footer_branch
      %25 = sbr.rel target = $region3
    $region8: #{tpu_custom_call.1} parent=1 // loop_exit
      _
    %729 = vsyncpa [#allocation3], 1
    %s730 = scalar_lea.sflag [#allocation3], 1
    %731 = vsyncpa %s730, 1
    %732 = vsyncpa [#allocation6], 1
    %733 = vsyncpa [#allocation9], 1
    %734 = vsyncpa [#allocation4], 1
    %s735 = scalar_lea.sflag [#allocation4], 1
    %736 = vsyncpa %s735, 1
    %737 = vsyncpa [#allocation12], 1
    %s738 = scalar_lea.sflag [#allocation12], 1
    %739 = vsyncpa %s738, 1

</llo_original>
